<compile_context>
chip_gen: v6e
topology: v6e:2x2x1
jax: 0.10.0
libtpu: 0.0.40
codegen_flags: <defaults>
</compile_context>

<pallas_src>
import math
from functools import partial

import jax
import jax.numpy as jnp
from jax.experimental import pallas as pl
from jax.experimental.pallas import tpu as pltpu


# ---------------------------------------------------------------------------
# Small synthetic AST config (real AST: hidden=768, 12 heads, 12 layers).
# ---------------------------------------------------------------------------
CFG = dict(
    hidden=32,      # hidden size
    heads=4,        # attention heads
    head_dim=8,     # hidden / heads
    mlp=64,         # intermediate size
    layers=2,       # encoder layers
    patch=16,       # conv kernel (16x16), as in AST
    f_stride=10,    # frequency stride ("10-10" checkpoint)
    t_stride=10,    # time stride
    ln_eps=1e-12,   # HF AST layer_norm_eps
)

BF16 = jnp.bfloat16
VMEM_LIMIT = 32 * 1024 * 1024   # explicit scoped-VMEM budget (safe on v5e/v6e/v7x)


def _pick_gelu_dtype():
    # v6e/v7x have bf16 VPU/EUP (~2x transcendental rate, half the vreg
    # pressure for the (S, mlp) activation); v5e and older do not -> f32 there.
    try:
        kind = jax.devices()[0].device_kind.lower()
    except Exception:
        return jnp.float32
    return BF16 if ("v6" in kind or "v7" in kind) else jnp.float32


GELU_DTYPE = _pick_gelu_dtype()


# ---------------------------------------------------------------------------
# In-kernel helpers
# ---------------------------------------------------------------------------
def _layernorm(x, g, b, eps):
    mu = jnp.mean(x, axis=-1, keepdims=True)
    xc = x - mu
    var = jnp.mean(xc * xc, axis=-1, keepdims=True)
    return xc * jax.lax.rsqrt(var + eps) * g + b


def _gelu(y):
    # TODO(synk): HF AST uses exact (erf) GELU; tanh approximation used here.
    c = math.sqrt(2.0 / math.pi)
    return 0.5 * y * (1.0 + jnp.tanh(c * (y + 0.044715 * y * y * y)))


# ---------------------------------------------------------------------------
# Kernel 1: patch projection + CLS/dist prepend + positional add, fused.
#   patches (1,P,pp) bf16  @ w (pp,h) bf16  -> rows 2..S-1 of the output
#   rows 0..1 = pos[0:2] + cls/dist (precombined on the host side of the call)
#   output is the bf16 residual stream consumed directly by layer 0.
# ---------------------------------------------------------------------------
def _embed_kernel(patches_ref, w_ref, b_ref, tokpos_ref, pospat_ref, o_ref):
    P = patches_ref.shape[1]
    proj = jnp.dot(patches_ref[0], w_ref[...],
                   preferred_element_type=jnp.float32) + b_ref[...]        # (P, h) f32
    o_ref[0, pl.ds(0, 2), :] = tokpos_ref[...].astype(o_ref.dtype)          # CLS + dist (+pos)
    o_ref[0, pl.ds(2, P), :] = (proj + pospat_ref[...]).astype(o_ref.dtype)  # patches (+pos)


def pallas_embed(patches_bf16, w_bf16, b, tokpos, pospat):
    B, P, KK = patches_bf16.shape
    h = w_bf16.shape[1]
    S = P + 2
    return pl.pallas_call(
        _embed_kernel,
        out_shape=jax.ShapeDtypeStruct((B, S, h), BF16),
        grid=(B,),
        in_specs=[
            pl.BlockSpec((1, P, KK), lambda i: (i, 0, 0)),
            pl.BlockSpec((KK, h), lambda i: (0, 0)),
            pl.BlockSpec((1, h), lambda i: (0, 0)),
            pl.BlockSpec((2, h), lambda i: (0, 0)),
            pl.BlockSpec((P, h), lambda i: (0, 0)),
        ],
        out_specs=pl.BlockSpec((1, S, h), lambda i: (i, 0, 0)),
        compiler_params=pltpu.CompilerParams(
            dimension_semantics=("parallel",),
            vmem_limit_bytes=VMEM_LIMIT),
    )(patches_bf16, w_bf16, b.reshape(1, h), tokpos, pospat)


# ---------------------------------------------------------------------------
# Kernel 2: fully fused transformer encoder layer (one pallas_call per layer)
# ---------------------------------------------------------------------------
def _encoder_layer_kernel(hs_ref,
                          ln1_g_ref, ln1_b_ref,
                          wqkv_ref, bqkv_ref,
                          wo_ref, bo_ref,
                          ln2_g_ref, ln2_b_ref,
                          w1_ref, b1_ref,
                          w2_ref, b2_ref,
                          o_ref,
                          ctx_ref,            # (S, h) f32 VMEM scratch
                          *, heads, head_dim, eps, scale, gelu_dtype):
    x = hs_ref[0].astype(jnp.float32)          # (S, h) — bf16 residual stream, f32 math
    h = heads * head_dim

    # ---- attention branch: LN1 -> fused QKV -> per-head SDPA -> Wo -> +res ----
    xn = _layernorm(x, ln1_g_ref[...], ln1_b_ref[...], eps)
    qkv = jnp.dot(xn.astype(BF16), wqkv_ref[...],
                  preferred_element_type=jnp.float32) + bqkv_ref[...]      # (S, 3h) f32
    # softmax scale folded into q (an (S,h) multiply, not an (S,S) one per head)
    q = (qkv[:, 0 * h:1 * h] * scale).astype(BF16)
    k = qkv[:, 1 * h:2 * h].astype(BF16)
    v = qkv[:, 2 * h:3 * h].astype(BF16)

    # Each head's context is written straight into its VMEM scratch slice: no
    # jnp.concatenate of head outputs, and per-head intermediates (s/e/p) die
    # at the scratch store.
    # TODO(synk): at real head counts (12) use lax.fori_loop + flash-style KV
    # streaming instead of this static unroll.
    for hd in range(heads):
        lo = hd * head_dim
        qh = q[:, lo:lo + head_dim]
        kh = k[:, lo:lo + head_dim]
        vh = v[:, lo:lo + head_dim]
        # contract Dh on both sides -> no explicit K transpose materialized
        s = jax.lax.dot_general(qh, kh, (((1,), (1,)), ((), ())),
                                preferred_element_type=jnp.float32)        # (S, S)
        m = jnp.max(s, axis=-1, keepdims=True)
        e = jnp.exp(s - m)
        inv = pl.reciprocal(jnp.sum(e, axis=-1, keepdims=True), approx=True)
        p = (e * inv).astype(BF16)
        ctx_ref[:, lo:lo + head_dim] = jnp.dot(p, vh,
                                               preferred_element_type=jnp.float32)

    attn_out = jnp.dot(ctx_ref[...].astype(BF16), wo_ref[...],
                       preferred_element_type=jnp.float32) + bo_ref[...]
    x1 = x + attn_out                                  # residual 1 (f32, in-kernel)

    # ---- MLP branch: LN2 -> W1 + GELU -> W2 -> +res ----
    yn = _layernorm(x1, ln2_g_ref[...], ln2_b_ref[...], eps)
    mid = jnp.dot(yn.astype(BF16), w1_ref[...],
                  preferred_element_type=jnp.float32) + b1_ref[...]
    mid = _gelu(mid.astype(gelu_dtype))                # bf16 EUP on v6e/v7x, f32 on v5e
    out = jnp.dot(mid.astype(BF16), w2_ref[...],
                  preferred_element_type=jnp.float32) + b2_ref[...]
    o_ref[0] = (x1 + out).astype(o_ref.dtype)          # residual 2 in f32, stored bf16


def pallas_encoder_layer(hs, lp, cfg):
    B, S, h = hs.shape
    H, Dh, mlp = cfg["heads"], cfg["head_dim"], cfg["mlp"]
    scale = 1.0 / math.sqrt(Dh)

    vec = lambda a: a.reshape(1, -1)
    const2d = lambda r, c: pl.BlockSpec((r, c), lambda i: (0, 0))
    seq_spec = pl.BlockSpec((1, S, h), lambda i: (i, 0, 0))

    return pl.pallas_call(
        partial(_encoder_layer_kernel, heads=H, head_dim=Dh,
                eps=cfg["ln_eps"], scale=scale, gelu_dtype=GELU_DTYPE),
        out_shape=jax.ShapeDtypeStruct((B, S, h), BF16),
        grid=(B,),
        in_specs=[
            seq_spec,
            const2d(1, h), const2d(1, h),            # ln1 gamma/beta
            const2d(h, 3 * h), const2d(1, 3 * h),    # fused wqkv, bqkv
            const2d(h, h), const2d(1, h),            # wo, bo
            const2d(1, h), const2d(1, h),            # ln2 gamma/beta
            const2d(h, mlp), const2d(1, mlp),        # w1, b1
            const2d(mlp, h), const2d(1, h),          # w2, b2
        ],
        out_specs=seq_spec,
        scratch_shapes=[pltpu.VMEM((S, h), jnp.float32)],
        input_output_aliases={0: 0},                 # update the residual stream in place
        compiler_params=pltpu.CompilerParams(
            dimension_semantics=("parallel",),
            vmem_limit_bytes=VMEM_LIMIT),
    )(hs,
      vec(lp["ln1_g"]), vec(lp["ln1_b"]),
      lp["wqkv"], vec(lp["bqkv"]),
      lp["wo"], vec(lp["bo"]),
      vec(lp["ln2_g"]), vec(lp["ln2_b"]),
      lp["w1"], vec(lp["b1"]),
      lp["w2"], vec(lp["b2"]))


# ---------------------------------------------------------------------------
# Kernel 3: final LayerNorm + AST pooler, fused.  Only an 8-row (sublane
# aligned) tile of the sequence is DMA'd per batch item (tokens 0 and 1 are
# all the pooler reads).
# ---------------------------------------------------------------------------
def _pool_kernel(hs_ref, g_ref, b_ref, o_ref, *, eps):
    t = hs_ref[0][0:2, :].astype(jnp.float32)                   # (2, h): CLS + dist
    t = _layernorm(t, g_ref[...], b_ref[...], eps)
    o_ref[0] = (0.5 * (t[0:1, :] + t[1:2, :])).astype(o_ref.dtype)


def pallas_final_pool(hs, g, b, eps):
    B, S, h = hs.shape
    rows = 8 if S >= 8 else S
    out = pl.pallas_call(
        partial(_pool_kernel, eps=eps),
        out_shape=jax.ShapeDtypeStruct((B, 1, h), jnp.float32),
        grid=(B,),
        in_specs=[pl.BlockSpec((1, rows, h), lambda i: (i, 0, 0)),
                  pl.BlockSpec((1, h), lambda i: (0, 0)),
                  pl.BlockSpec((1, h), lambda i: (0, 0))],
        out_specs=pl.BlockSpec((1, 1, h), lambda i: (i, 0, 0)),
        compiler_params=pltpu.CompilerParams(
            dimension_semantics=("parallel",),
            vmem_limit_bytes=VMEM_LIMIT),
    )(hs, g.reshape(1, h), b.reshape(1, h))
    return out.reshape(B, h)


# ---------------------------------------------------------------------------
# Glue: im2col matching ASTPatchEmbeddings, via one XLA conv (no Python loop).
# Input (B,T,F) -> (B,1,F,T) image; patch flatten order = (pf*nt + pt), inner
# flatten row-major over (freq, time), matching the conv weight layout
# (PyTorch Conv2d weight (O, 1, kh, kw) flattened row-major).
# ---------------------------------------------------------------------------
def extract_patches(x, cfg):
    B = x.shape[0]
    p, fs, ts = cfg["patch"], cfg["f_stride"], cfg["t_stride"]
    img = jnp.transpose(x, (0, 2, 1))[:, None, :, :]            # (B, 1, F, T)
    pat = jax.lax.conv_general_dilated_patches(
        img, (p, p), (fs, ts), "VALID")                          # (B, p*p, nf, nt)
    nf, nt = pat.shape[2], pat.shape[3]
    patches = jnp.transpose(pat, (0, 2, 3, 1)).reshape(B, nf * nt, p * p)
    return patches


# ---------------------------------------------------------------------------
# Deterministic synthetic parameters (stand-in for the pretrained checkpoint).
# Matmul weights stored in bf16 (f32 accumulation in-kernel); LN / bias in f32.
# ---------------------------------------------------------------------------
def init_params(key, cfg, num_patches):
    h, mlp, p = cfg["hidden"], cfg["mlp"], cfg["patch"]
    seq = num_patches + 2            # + CLS + distillation token
    keys = jax.random.split(key, 8 + cfg["layers"])

    def nrm(k, shape):
        return 0.02 * jax.random.normal(k, shape, dtype=jnp.float32)

    params = {
        "patch_w": nrm(keys[0], (p * p, h)).astype(BF16),
        "patch_b": jnp.zeros((h,), jnp.float32),
        "cls":  nrm(keys[1], (1, 1, h)),
        "dist": nrm(keys[2], (1, 1, h)),
        "pos":  nrm(keys[3], (1, seq, h)),
        "ln_f_g": jnp.ones((h,), jnp.float32),
        "ln_f_b": jnp.zeros((h,), jnp.float32),
        "layers": [],
    }
    for li in range(cfg["layers"]):
        lk = jax.random.split(keys[8 + li], 6)
        wq, wk, wv = nrm(lk[0], (h, h)), nrm(lk[1], (h, h)), nrm(lk[2], (h, h))
        params["layers"].append({
            "ln1_g": jnp.ones((h,), jnp.float32), "ln1_b": jnp.zeros((h,), jnp.float32),
            # fused QKV: one (h, 3h) matmul instead of three (h, h) ones
            "wqkv": jnp.concatenate([wq, wk, wv], axis=1).astype(BF16),
            "bqkv": jnp.zeros((3 * h,), jnp.float32),
            "wo": nrm(lk[3], (h, h)).astype(BF16), "bo": jnp.zeros((h,), jnp.float32),
            "ln2_g": jnp.ones((h,), jnp.float32), "ln2_b": jnp.zeros((h,), jnp.float32),
            "w1": nrm(lk[4], (h, mlp)).astype(BF16), "b1": jnp.zeros((mlp,), jnp.float32),
            "w2": nrm(lk[5], (mlp, h)).astype(BF16), "b2": jnp.zeros((h,), jnp.float32),
        })
    return params


# ---------------------------------------------------------------------------
# Full forward pass (ASTModel -> pooler_output), pre-LN ViT encoder.
# ---------------------------------------------------------------------------
def ast_forward(params, x, cfg):
    h = cfg["hidden"]

    # --- patch extraction (XLA im2col), cast to bf16 to halve the input DMA ---
    patches = extract_patches(x, cfg).astype(BF16)            # (B, P, p*p)

    # Tiny parameter prep (O(S*h), independent of batch): positional rows for
    # the CLS/distillation tokens already include those token embeddings, so
    # the embed kernel can write the full residual stream in one pass.
    tokpos = params["pos"][0, 0:2] + jnp.concatenate(
        [params["cls"][0], params["dist"][0]], axis=0)         # (2, h)
    pospat = params["pos"][0, 2:]                              # (P, h)

    # --- fused patch-embed + token prepend + pos add -> bf16 residual stream ---
    hs = pallas_embed(patches, params["patch_w"], params["patch_b"],
                      tokpos, pospat)                          # (B, S, h) bf16

    # --- fused encoder layers: one pallas_call each, residual stream in place ---
    for lp in params["layers"]:
        hs = pallas_encoder_layer(hs, lp, cfg)

    # --- fused final LayerNorm + AST pooler: mean of CLS and distillation ---
    pooled = pallas_final_pool(hs, params["ln_f_g"], params["ln_f_b"], cfg["ln_eps"])
    # dropout: module default p=None (and eval mode) -> identity, omitted.
    return pooled


# ---------------------------------------------------------------------------
if __name__ == "__main__":
    cfg = CFG
    key = jax.random.PRNGKey(0)
    kx, kp = jax.random.split(key)

    # Small spectrogram: batch=2, 36 time frames, 36 mel bins
    # -> 3x3 = 9 patches (kernel 16, stride 10), sequence length 11.
    B, T, F = 2, 36, 36
    x = jax.random.normal(kx, (B, T, F), dtype=jnp.float32)

    p = cfg["patch"]
    nf = (F - p) // cfg["f_stride"] + 1
    nt = (T - p) // cfg["t_stride"] + 1
    params = init_params(kp, cfg, nf * nt)

    out = jax.jit(lambda pr, xx: ast_forward(pr, xx, cfg))(params, x)
    out = jax.block_until_ready(out)
    assert out.shape == (B, cfg["hidden"]), out.shape
    assert bool(jnp.all(jnp.isfinite(out)))
    print("KERNEL_OK")
</pallas_src>

<mosaic_0001>
module attributes {stable_mosaic.version = 11 : i64} {
  func.func @_embed_kernel(%arg0: i32, %arg1: memref<1x9x256xbf16, #tpu.memory_space<vmem>>, %arg2: memref<256x32xbf16, #tpu.memory_space<vmem>>, %arg3: memref<1x32xf32, #tpu.memory_space<vmem>>, %arg4: memref<2x32xf32, #tpu.memory_space<vmem>>, %arg5: memref<9x32xf32, #tpu.memory_space<vmem>>, %arg6: memref<1x11x32xbf16, #tpu.memory_space<vmem>>) attributes {dimension_semantics = [#tpu.dimension_semantics<parallel>], iteration_bounds = array<i64: 2>, scalar_prefetch = 0 : i64, scratch_operands = 0 : i64, tpu.core_type = #tpu.core_type<tc>, window_params = [{transform_indices = @transform_0, window_bounds = array<i64: 1, 9, 256>}, {pipeline_mode = #tpu.pipeline_mode<synchronous>, transform_indices = @transform_1, window_bounds = array<i64: 256, 32>}, {pipeline_mode = #tpu.pipeline_mode<synchronous>, transform_indices = @transform_2, window_bounds = array<i64: 1, 32>}, {pipeline_mode = #tpu.pipeline_mode<synchronous>, transform_indices = @transform_3, window_bounds = array<i64: 2, 32>}, {pipeline_mode = #tpu.pipeline_mode<synchronous>, transform_indices = @transform_4, window_bounds = array<i64: 9, 32>}, {transform_indices = @transform_5, window_bounds = array<i64: 1, 11, 32>}]} {
    %c0 = arith.constant 0 : index
    %c0_0 = arith.constant 0 : index
    %c0_1 = arith.constant 0 : index
    %0 = vector.load %arg1[%c0, %c0_0, %c0_1] : memref<1x9x256xbf16, #tpu.memory_space<vmem>>, vector<1x9x256xbf16>
    %1 = vector.shape_cast %0 : vector<1x9x256xbf16> to vector<9x256xbf16>
    %c0_2 = arith.constant 0 : index
    %c0_3 = arith.constant 0 : index
    %2 = vector.load %arg2[%c0_2, %c0_3] : memref<256x32xbf16, #tpu.memory_space<vmem>>, vector<256x32xbf16>
    %cst = arith.constant dense<0.000000e+00> : vector<9x32xf32>
    %3 = tpu.matmul %1, %2, %cst {dimension_numbers = #tpu.dot_dimension_numbers<[1], [0], [0], [1], [0, 0, 1, 1], [], []>} : vector<9x256xbf16>, vector<256x32xbf16>, vector<9x32xf32> -> vector<9x32xf32>
    %c0_4 = arith.constant 0 : index
    %c0_5 = arith.constant 0 : index
    %4 = vector.load %arg3[%c0_4, %c0_5] : memref<1x32xf32, #tpu.memory_space<vmem>>, vector<1x32xf32>
    %5 = vector.broadcast %4 : vector<1x32xf32> to vector<9x32xf32>
    %6 = arith.addf %3, %5 : vector<9x32xf32>
    %c0_6 = arith.constant 0 : index
    %c0_7 = arith.constant 0 : index
    %7 = vector.load %arg4[%c0_6, %c0_7] : memref<2x32xf32, #tpu.memory_space<vmem>>, vector<2x32xf32>
    %8 = arith.truncf %7 : vector<2x32xf32> to vector<2x32xbf16>
    %c0_8 = arith.constant 0 : index
    %c0_9 = arith.constant 0 : index
    %c0_10 = arith.constant 0 : index
    %9 = vector.load %arg6[%c0_8, %c0_9, %c0_10] : memref<1x11x32xbf16, #tpu.memory_space<vmem>>, vector<1x2x32xbf16>
    %10 = vector.shape_cast %9 : vector<1x2x32xbf16> to vector<2x32xbf16>
    %11 = vector.shape_cast %8 : vector<2x32xbf16> to vector<1x2x32xbf16>
    tpu.vector_store %arg6[%c0_8, %c0_9, %c0_10], %11 {strides = array<i32>} : memref<1x11x32xbf16, #tpu.memory_space<vmem>>, vector<1x2x32xbf16>,
    %c0_11 = arith.constant 0 : index
    %c0_12 = arith.constant 0 : index
    %12 = vector.load %arg5[%c0_11, %c0_12] : memref<9x32xf32, #tpu.memory_space<vmem>>, vector<9x32xf32>
    %13 = arith.addf %6, %12 : vector<9x32xf32>
    %14 = arith.truncf %13 : vector<9x32xf32> to vector<9x32xbf16>
    %c0_13 = arith.constant 0 : index
    %c2 = arith.constant 2 : index
    %c0_14 = arith.constant 0 : index
    %15 = vector.load %arg6[%c0_13, %c2, %c0_14] : memref<1x11x32xbf16, #tpu.memory_space<vmem>>, vector<1x9x32xbf16>
    %16 = vector.shape_cast %15 : vector<1x9x32xbf16> to vector<9x32xbf16>
    %17 = vector.shape_cast %14 : vector<9x32xbf16> to vector<1x9x32xbf16>
    tpu.vector_store %arg6[%c0_13, %c2, %c0_14], %17 {strides = array<i32>} : memref<1x11x32xbf16, #tpu.memory_space<vmem>>, vector<1x9x32xbf16>,
    return
  }
  func.func @transform_0(%arg0: i32) -> (i32, i32, i32) {
    %c0_i32 = arith.constant 0 : i32
    %c0_i32_0 = arith.constant 0 : i32
    %c0_i32_1 = arith.constant 0 : i32
    return %arg0, %c0_i32, %c0_i32_0 : i32, i32, i32
  }
  func.func @transform_1(%arg0: i32) -> (i32, i32) {
    %c0_i32 = arith.constant 0 : i32
    %c0_i32_0 = arith.constant 0 : i32
    %c0_i32_1 = arith.constant 0 : i32
    return %c0_i32, %c0_i32_0 : i32, i32
  }
  func.func @transform_2(%arg0: i32) -> (i32, i32) {
    %c0_i32 = arith.constant 0 : i32
    %c0_i32_0 = arith.constant 0 : i32
    %c0_i32_1 = arith.constant 0 : i32
    return %c0_i32, %c0_i32_0 : i32, i32
  }
  func.func @transform_3(%arg0: i32) -> (i32, i32) {
    %c0_i32 = arith.constant 0 : i32
    %c0_i32_0 = arith.constant 0 : i32
    %c0_i32_1 = arith.constant 0 : i32
    return %c0_i32, %c0_i32_0 : i32, i32
  }
  func.func @transform_4(%arg0: i32) -> (i32, i32) {
    %c0_i32 = arith.constant 0 : i32
    %c0_i32_0 = arith.constant 0 : i32
    %c0_i32_1 = arith.constant 0 : i32
    return %c0_i32, %c0_i32_0 : i32, i32
  }
  func.func @transform_5(%arg0: i32) -> (i32, i32, i32) {
    %c0_i32 = arith.constant 0 : i32
    %c0_i32_0 = arith.constant 0 : i32
    %c0_i32_1 = arith.constant 0 : i32
    return %arg0, %c0_i32, %c0_i32_0 : i32, i32, i32
  }
}

module attributes {stable_mosaic.version = 11 : i64} {
  func.func @_encoder_layer_kernel(%arg0: i32, %arg1: memref<1x11x32xbf16, #tpu.memory_space<vmem>>, %arg2: memref<1x32xf32, #tpu.memory_space<vmem>>, %arg3: memref<1x32xf32, #tpu.memory_space<vmem>>, %arg4: memref<32x96xbf16, #tpu.memory_space<vmem>>, %arg5: memref<1x96xf32, #tpu.memory_space<vmem>>, %arg6: memref<32x32xbf16, #tpu.memory_space<vmem>>, %arg7: memref<1x32xf32, #tpu.memory_space<vmem>>, %arg8: memref<1x32xf32, #tpu.memory_space<vmem>>, %arg9: memref<1x32xf32, #tpu.memory_space<vmem>>, %arg10: memref<32x64xbf16, #tpu.memory_space<vmem>>, %arg11: memref<1x64xf32, #tpu.memory_space<vmem>>, %arg12: memref<64x32xbf16, #tpu.memory_space<vmem>>, %arg13: memref<1x32xf32, #tpu.memory_space<vmem>>, %arg14: memref<1x11x32xbf16, #tpu.memory_space<vmem>>, %arg15: memref<11x32xf32, #tpu.memory_space<vmem>>) attributes {dimension_semantics = [#tpu.dimension_semantics<parallel>], iteration_bounds = array<i64: 2>, scalar_prefetch = 0 : i64, scratch_operands = 1 : i64, tpu.core_type = #tpu.core_type<tc>, window_params = [{transform_indices = @transform_0, window_bounds = array<i64: 1, 11, 32>}, {pipeline_mode = #tpu.pipeline_mode<synchronous>, transform_indices = @transform_1, window_bounds = array<i64: 1, 32>}, {pipeline_mode = #tpu.pipeline_mode<synchronous>, transform_indices = @transform_2, window_bounds = array<i64: 1, 32>}, {pipeline_mode = #tpu.pipeline_mode<synchronous>, transform_indices = @transform_3, window_bounds = array<i64: 32, 96>}, {pipeline_mode = #tpu.pipeline_mode<synchronous>, transform_indices = @transform_4, window_bounds = array<i64: 1, 96>}, {pipeline_mode = #tpu.pipeline_mode<synchronous>, transform_indices = @transform_5, window_bounds = array<i64: 32, 32>}, {pipeline_mode = #tpu.pipeline_mode<synchronous>, transform_indices = @transform_6, window_bounds = array<i64: 1, 32>}, {pipeline_mode = #tpu.pipeline_mode<synchronous>, transform_indices = @transform_7, window_bounds = array<i64: 1, 32>}, {pipeline_mode = #tpu.pipeline_mode<synchronous>, transform_indices = @transform_8, window_bounds = array<i64: 1, 32>}, {pipeline_mode = #tpu.pipeline_mode<synchronous>, transform_indices = @transform_9, window_bounds = array<i64: 32, 64>}, {pipeline_mode = #tpu.pipeline_mode<synchronous>, transform_indices = @transform_10, window_bounds = array<i64: 1, 64>}, {pipeline_mode = #tpu.pipeline_mode<synchronous>, transform_indices = @transform_11, window_bounds = array<i64: 64, 32>}, {pipeline_mode = #tpu.pipeline_mode<synchronous>, transform_indices = @transform_12, window_bounds = array<i64: 1, 32>}, {transform_indices = @transform_13, window_bounds = array<i64: 1, 11, 32>}]} {
    %c0 = arith.constant 0 : index
    %c0_0 = arith.constant 0 : index
    %c0_1 = arith.constant 0 : index
    %0 = vector.load %arg1[%c0, %c0_0, %c0_1] : memref<1x11x32xbf16, #tpu.memory_space<vmem>>, vector<1x11x32xbf16>
    %1 = vector.shape_cast %0 : vector<1x11x32xbf16> to vector<11x32xbf16>
    %2 = arith.extf %1 : vector<11x32xbf16> to vector<11x32xf32>
    %c0_2 = arith.constant 0 : index
    %c0_3 = arith.constant 0 : index
    %3 = vector.load %arg2[%c0_2, %c0_3] : memref<1x32xf32, #tpu.memory_space<vmem>>, vector<1x32xf32>
    %c0_4 = arith.constant 0 : index
    %c0_5 = arith.constant 0 : index
    %4 = vector.load %arg3[%c0_4, %c0_5] : memref<1x32xf32, #tpu.memory_space<vmem>>, vector<1x32xf32>
    %cst = arith.constant dense<0.000000e+00> : vector<11xf32>
    %5 = vector.multi_reduction <add>, %2, %cst [1] : vector<11x32xf32> to vector<11xf32>
    %6 = vector.shape_cast %5 : vector<11xf32> to vector<11x1xf32>
    %cst_6 = arith.constant 3.200000e+01 : f32
    %7 = vector.broadcast %cst_6 : f32 to vector<11x1xf32>
    %8 = arith.divf %6, %7 : vector<11x1xf32>
    %9 = vector.broadcast %8 : vector<11x1xf32> to vector<11x32xf32>
    %10 = arith.subf %2, %9 : vector<11x32xf32>
    %11 = arith.mulf %10, %10 : vector<11x32xf32>
    %cst_7 = arith.constant dense<0.000000e+00> : vector<11xf32>
    %12 = vector.multi_reduction <add>, %11, %cst_7 [1] : vector<11x32xf32> to vector<11xf32>
    %13 = vector.shape_cast %12 : vector<11xf32> to vector<11x1xf32>
    %cst_8 = arith.constant 3.200000e+01 : f32
    %14 = vector.broadcast %cst_8 : f32 to vector<11x1xf32>
    %15 = arith.divf %13, %14 : vector<11x1xf32>
    %cst_9 = arith.constant 9.99999996E-13 : f32
    %16 = vector.broadcast %cst_9 : f32 to vector<11x1xf32>
    %17 = arith.addf %15, %16 : vector<11x1xf32>
    %18 = math.rsqrt %17 : vector<11x1xf32>
    %19 = vector.broadcast %18 : vector<11x1xf32> to vector<11x32xf32>
    %20 = arith.mulf %10, %19 : vector<11x32xf32>
    %21 = vector.broadcast %3 : vector<1x32xf32> to vector<11x32xf32>
    %22 = arith.mulf %20, %21 : vector<11x32xf32>
    %23 = vector.broadcast %4 : vector<1x32xf32> to vector<11x32xf32>
    %24 = arith.addf %22, %23 : vector<11x32xf32>
    %25 = arith.truncf %24 : vector<11x32xf32> to vector<11x32xbf16>
    %c0_10 = arith.constant 0 : index
    %c0_11 = arith.constant 0 : index
    %26 = vector.load %arg4[%c0_10, %c0_11] : memref<32x96xbf16, #tpu.memory_space<vmem>>, vector<32x96xbf16>
    %cst_12 = arith.constant dense<0.000000e+00> : vector<11x96xf32>
    %27 = tpu.matmul %25, %26, %cst_12 {dimension_numbers = #tpu.dot_dimension_numbers<[1], [0], [0], [1], [0, 0, 1, 1], [], []>} : vector<11x32xbf16>, vector<32x96xbf16>, vector<11x96xf32> -> vector<11x96xf32>
    %c0_13 = arith.constant 0 : index
    %c0_14 = arith.constant 0 : index
    %28 = vector.load %arg5[%c0_13, %c0_14] : memref<1x96xf32, #tpu.memory_space<vmem>>, vector<1x96xf32>
    %29 = vector.broadcast %28 : vector<1x96xf32> to vector<11x96xf32>
    %30 = arith.addf %27, %29 : vector<11x96xf32>
    %31 = vector.extract_strided_slice %30 {offsets = [0, 0], sizes = [11, 32], strides = [1, 1]} : vector<11x96xf32> to vector<11x32xf32>
    %cst_15 = arith.constant 0.353553385 : f32
    %32 = vector.broadcast %cst_15 : f32 to vector<11x32xf32>
    %33 = arith.mulf %31, %32 : vector<11x32xf32>
    %34 = arith.truncf %33 : vector<11x32xf32> to vector<11x32xbf16>
    %35 = vector.extract_strided_slice %30 {offsets = [0, 32], sizes = [11, 32], strides = [1, 1]} : vector<11x96xf32> to vector<11x32xf32>
    %36 = arith.truncf %35 : vector<11x32xf32> to vector<11x32xbf16>
    %37 = vector.extract_strided_slice %30 {offsets = [0, 64], sizes = [11, 32], strides = [1, 1]} : vector<11x96xf32> to vector<11x32xf32>
    %38 = arith.truncf %37 : vector<11x32xf32> to vector<11x32xbf16>
    %39 = vector.extract_strided_slice %34 {offsets = [0, 0], sizes = [11, 8], strides = [1, 1]} : vector<11x32xbf16> to vector<11x8xbf16>
    %40 = vector.extract_strided_slice %36 {offsets = [0, 0], sizes = [11, 8], strides = [1, 1]} : vector<11x32xbf16> to vector<11x8xbf16>
    %41 = vector.extract_strided_slice %38 {offsets = [0, 0], sizes = [11, 8], strides = [1, 1]} : vector<11x32xbf16> to vector<11x8xbf16>
    %cst_16 = arith.constant dense<0.000000e+00> : vector<11x11xf32>
    %42 = tpu.matmul %39, %40, %cst_16 {dimension_numbers = #tpu.dot_dimension_numbers<[1], [1], [0], [0], [0, 0, 1, 0], [], []>} : vector<11x8xbf16>, vector<11x8xbf16>, vector<11x11xf32> -> vector<11x11xf32>
    %cst_17 = arith.constant dense<0xFF800000> : vector<11xf32>
    %43 = vector.multi_reduction <maximumf>, %42, %cst_17 [1] : vector<11x11xf32> to vector<11xf32>
    %44 = vector.shape_cast %43 : vector<11xf32> to vector<11x1xf32>
    %45 = vector.broadcast %44 : vector<11x1xf32> to vector<11x11xf32>
    %46 = arith.subf %42, %45 : vector<11x11xf32>
    %47 = math.exp %46 : vector<11x11xf32>
    %cst_18 = arith.constant dense<0.000000e+00> : vector<11xf32>
    %48 = vector.multi_reduction <add>, %47, %cst_18 [1] : vector<11x11xf32> to vector<11xf32>
    %49 = vector.shape_cast %48 : vector<11xf32> to vector<11x1xf32>
    %50 = tpu.reciprocal %49 {approx = true} : vector<11x1xf32> -> vector<11x1xf32>
    %51 = vector.broadcast %50 : vector<11x1xf32> to vector<11x11xf32>
    %52 = arith.mulf %47, %51 : vector<11x11xf32>
    %53 = arith.truncf %52 : vector<11x11xf32> to vector<11x11xbf16>
    %cst_19 = arith.constant dense<0.000000e+00> : vector<11x8xf32>
    %54 = tpu.matmul %53, %41, %cst_19 {dimension_numbers = #tpu.dot_dimension_numbers<[1], [0], [0], [1], [0, 0, 1, 1], [], []>} : vector<11x11xbf16>, vector<11x8xbf16>, vector<11x8xf32> -> vector<11x8xf32>
    %c0_20 = arith.constant 0 : index
    %c0_21 = arith.constant 0 : index
    %55 = vector.load %arg15[%c0_20, %c0_21] : memref<11x32xf32, #tpu.memory_space<vmem>>, vector<11x8xf32>
    tpu.vector_store %arg15[%c0_20, %c0_21], %54 {strides = array<i32>} : memref<11x32xf32, #tpu.memory_space<vmem>>, vector<11x8xf32>,
    %56 = vector.extract_strided_slice %34 {offsets = [0, 8], sizes = [11, 8], strides = [1, 1]} : vector<11x32xbf16> to vector<11x8xbf16>
    %57 = vector.extract_strided_slice %36 {offsets = [0, 8], sizes = [11, 8], strides = [1, 1]} : vector<11x32xbf16> to vector<11x8xbf16>
    %58 = vector.extract_strided_slice %38 {offsets = [0, 8], sizes = [11, 8], strides = [1, 1]} : vector<11x32xbf16> to vector<11x8xbf16>
    %cst_22 = arith.constant dense<0.000000e+00> : vector<11x11xf32>
    %59 = tpu.matmul %56, %57, %cst_22 {dimension_numbers = #tpu.dot_dimension_numbers<[1], [1], [0], [0], [0, 0, 1, 0], [], []>} : vector<11x8xbf16>, vector<11x8xbf16>, vector<11x11xf32> -> vector<11x11xf32>
    %cst_23 = arith.constant dense<0xFF800000> : vector<11xf32>
    %60 = vector.multi_reduction <maximumf>, %59, %cst_23 [1] : vector<11x11xf32> to vector<11xf32>
    %61 = vector.shape_cast %60 : vector<11xf32> to vector<11x1xf32>
    %62 = vector.broadcast %61 : vector<11x1xf32> to vector<11x11xf32>
    %63 = arith.subf %59, %62 : vector<11x11xf32>
    %64 = math.exp %63 : vector<11x11xf32>
    %cst_24 = arith.constant dense<0.000000e+00> : vector<11xf32>
    %65 = vector.multi_reduction <add>, %64, %cst_24 [1] : vector<11x11xf32> to vector<11xf32>
    %66 = vector.shape_cast %65 : vector<11xf32> to vector<11x1xf32>
    %67 = tpu.reciprocal %66 {approx = true} : vector<11x1xf32> -> vector<11x1xf32>
    %68 = vector.broadcast %67 : vector<11x1xf32> to vector<11x11xf32>
    %69 = arith.mulf %64, %68 : vector<11x11xf32>
    %70 = arith.truncf %69 : vector<11x11xf32> to vector<11x11xbf16>
    %cst_25 = arith.constant dense<0.000000e+00> : vector<11x8xf32>
    %71 = tpu.matmul %70, %58, %cst_25 {dimension_numbers = #tpu.dot_dimension_numbers<[1], [0], [0], [1], [0, 0, 1, 1], [], []>} : vector<11x11xbf16>, vector<11x8xbf16>, vector<11x8xf32> -> vector<11x8xf32>
    %c0_26 = arith.constant 0 : index
    %c8 = arith.constant 8 : index
    %72 = vector.load %arg15[%c0_26, %c8] : memref<11x32xf32, #tpu.memory_space<vmem>>, vector<11x8xf32>
    tpu.vector_store %arg15[%c0_26, %c8], %71 {strides = array<i32>} : memref<11x32xf32, #tpu.memory_space<vmem>>, vector<11x8xf32>,
    %73 = vector.extract_strided_slice %34 {offsets = [0, 16], sizes = [11, 8], strides = [1, 1]} : vector<11x32xbf16> to vector<11x8xbf16>
    %74 = vector.extract_strided_slice %36 {offsets = [0, 16], sizes = [11, 8], strides = [1, 1]} : vector<11x32xbf16> to vector<11x8xbf16>
    %75 = vector.extract_strided_slice %38 {offsets = [0, 16], sizes = [11, 8], strides = [1, 1]} : vector<11x32xbf16> to vector<11x8xbf16>
    %cst_27 = arith.constant dense<0.000000e+00> : vector<11x11xf32>
    %76 = tpu.matmul %73, %74, %cst_27 {dimension_numbers = #tpu.dot_dimension_numbers<[1], [1], [0], [0], [0, 0, 1, 0], [], []>} : vector<11x8xbf16>, vector<11x8xbf16>, vector<11x11xf32> -> vector<11x11xf32>
    %cst_28 = arith.constant dense<0xFF800000> : vector<11xf32>
    %77 = vector.multi_reduction <maximumf>, %76, %cst_28 [1] : vector<11x11xf32> to vector<11xf32>
    %78 = vector.shape_cast %77 : vector<11xf32> to vector<11x1xf32>
    %79 = vector.broadcast %78 : vector<11x1xf32> to vector<11x11xf32>
    %80 = arith.subf %76, %79 : vector<11x11xf32>
    %81 = math.exp %80 : vector<11x11xf32>
    %cst_29 = arith.constant dense<0.000000e+00> : vector<11xf32>
    %82 = vector.multi_reduction <add>, %81, %cst_29 [1] : vector<11x11xf32> to vector<11xf32>
    %83 = vector.shape_cast %82 : vector<11xf32> to vector<11x1xf32>
    %84 = tpu.reciprocal %83 {approx = true} : vector<11x1xf32> -> vector<11x1xf32>
    %85 = vector.broadcast %84 : vector<11x1xf32> to vector<11x11xf32>
    %86 = arith.mulf %81, %85 : vector<11x11xf32>
    %87 = arith.truncf %86 : vector<11x11xf32> to vector<11x11xbf16>
    %cst_30 = arith.constant dense<0.000000e+00> : vector<11x8xf32>
    %88 = tpu.matmul %87, %75, %cst_30 {dimension_numbers = #tpu.dot_dimension_numbers<[1], [0], [0], [1], [0, 0, 1, 1], [], []>} : vector<11x11xbf16>, vector<11x8xbf16>, vector<11x8xf32> -> vector<11x8xf32>
    %c0_31 = arith.constant 0 : index
    %c16 = arith.constant 16 : index
    %89 = vector.load %arg15[%c0_31, %c16] : memref<11x32xf32, #tpu.memory_space<vmem>>, vector<11x8xf32>
    tpu.vector_store %arg15[%c0_31, %c16], %88 {strides = array<i32>} : memref<11x32xf32, #tpu.memory_space<vmem>>, vector<11x8xf32>,
    %90 = vector.extract_strided_slice %34 {offsets = [0, 24], sizes = [11, 8], strides = [1, 1]} : vector<11x32xbf16> to vector<11x8xbf16>
    %91 = vector.extract_strided_slice %36 {offsets = [0, 24], sizes = [11, 8], strides = [1, 1]} : vector<11x32xbf16> to vector<11x8xbf16>
    %92 = vector.extract_strided_slice %38 {offsets = [0, 24], sizes = [11, 8], strides = [1, 1]} : vector<11x32xbf16> to vector<11x8xbf16>
    %cst_32 = arith.constant dense<0.000000e+00> : vector<11x11xf32>
    %93 = tpu.matmul %90, %91, %cst_32 {dimension_numbers = #tpu.dot_dimension_numbers<[1], [1], [0], [0], [0, 0, 1, 0], [], []>} : vector<11x8xbf16>, vector<11x8xbf16>, vector<11x11xf32> -> vector<11x11xf32>
    %cst_33 = arith.constant dense<0xFF800000> : vector<11xf32>
    %94 = vector.multi_reduction <maximumf>, %93, %cst_33 [1] : vector<11x11xf32> to vector<11xf32>
    %95 = vector.shape_cast %94 : vector<11xf32> to vector<11x1xf32>
    %96 = vector.broadcast %95 : vector<11x1xf32> to vector<11x11xf32>
    %97 = arith.subf %93, %96 : vector<11x11xf32>
    %98 = math.exp %97 : vector<11x11xf32>
    %cst_34 = arith.constant dense<0.000000e+00> : vector<11xf32>
    %99 = vector.multi_reduction <add>, %98, %cst_34 [1] : vector<11x11xf32> to vector<11xf32>
    %100 = vector.shape_cast %99 : vector<11xf32> to vector<11x1xf32>
    %101 = tpu.reciprocal %100 {approx = true} : vector<11x1xf32> -> vector<11x1xf32>
    %102 = vector.broadcast %101 : vector<11x1xf32> to vector<11x11xf32>
    %103 = arith.mulf %98, %102 : vector<11x11xf32>
    %104 = arith.truncf %103 : vector<11x11xf32> to vector<11x11xbf16>
    %cst_35 = arith.constant dense<0.000000e+00> : vector<11x8xf32>
    %105 = tpu.matmul %104, %92, %cst_35 {dimension_numbers = #tpu.dot_dimension_numbers<[1], [0], [0], [1], [0, 0, 1, 1], [], []>} : vector<11x11xbf16>, vector<11x8xbf16>, vector<11x8xf32> -> vector<11x8xf32>
    %c0_36 = arith.constant 0 : index
    %c24 = arith.constant 24 : index
    %106 = vector.load %arg15[%c0_36, %c24] : memref<11x32xf32, #tpu.memory_space<vmem>>, vector<11x8xf32>
    tpu.vector_store %arg15[%c0_36, %c24], %105 {strides = array<i32>} : memref<11x32xf32, #tpu.memory_space<vmem>>, vector<11x8xf32>,
    %c0_37 = arith.constant 0 : index
    %c0_38 = arith.constant 0 : index
    %107 = vector.load %arg15[%c0_37, %c0_38] : memref<11x32xf32, #tpu.memory_space<vmem>>, vector<11x32xf32>
    %108 = arith.truncf %107 : vector<11x32xf32> to vector<11x32xbf16>
    %c0_39 = arith.constant 0 : index
    %c0_40 = arith.constant 0 : index
    %109 = vector.load %arg6[%c0_39, %c0_40] : memref<32x32xbf16, #tpu.memory_space<vmem>>, vector<32x32xbf16>
    %cst_41 = arith.constant dense<0.000000e+00> : vector<11x32xf32>
    %110 = tpu.matmul %108, %109, %cst_41 {dimension_numbers = #tpu.dot_dimension_numbers<[1], [0], [0], [1], [0, 0, 1, 1], [], []>} : vector<11x32xbf16>, vector<32x32xbf16>, vector<11x32xf32> -> vector<11x32xf32>
    %c0_42 = arith.constant 0 : index
    %c0_43 = arith.constant 0 : index
    %111 = vector.load %arg7[%c0_42, %c0_43] : memref<1x32xf32, #tpu.memory_space<vmem>>, vector<1x32xf32>
    %112 = vector.broadcast %111 : vector<1x32xf32> to vector<11x32xf32>
    %113 = arith.addf %110, %112 : vector<11x32xf32>
    %114 = arith.addf %2, %113 : vector<11x32xf32>
    %c0_44 = arith.constant 0 : index
    %c0_45 = arith.constant 0 : index
    %115 = vector.load %arg8[%c0_44, %c0_45] : memref<1x32xf32, #tpu.memory_space<vmem>>, vector<1x32xf32>
    %c0_46 = arith.constant 0 : index
    %c0_47 = arith.constant 0 : index
    %116 = vector.load %arg9[%c0_46, %c0_47] : memref<1x32xf32, #tpu.memory_space<vmem>>, vector<1x32xf32>
    %cst_48 = arith.constant dense<0.000000e+00> : vector<11xf32>
    %117 = vector.multi_reduction <add>, %114, %cst_48 [1] : vector<11x32xf32> to vector<11xf32>
    %118 = vector.shape_cast %117 : vector<11xf32> to vector<11x1xf32>
    %cst_49 = arith.constant 3.200000e+01 : f32
    %119 = vector.broadcast %cst_49 : f32 to vector<11x1xf32>
    %120 = arith.divf %118, %119 : vector<11x1xf32>
    %121 = vector.broadcast %120 : vector<11x1xf32> to vector<11x32xf32>
    %122 = arith.subf %114, %121 : vector<11x32xf32>
    %123 = arith.mulf %122, %122 : vector<11x32xf32>
    %cst_50 = arith.constant dense<0.000000e+00> : vector<11xf32>
    %124 = vector.multi_reduction <add>, %123, %cst_50 [1] : vector<11x32xf32> to vector<11xf32>
    %125 = vector.shape_cast %124 : vector<11xf32> to vector<11x1xf32>
    %cst_51 = arith.constant 3.200000e+01 : f32
    %126 = vector.broadcast %cst_51 : f32 to vector<11x1xf32>
    %127 = arith.divf %125, %126 : vector<11x1xf32>
    %cst_52 = arith.constant 9.99999996E-13 : f32
    %128 = vector.broadcast %cst_52 : f32 to vector<11x1xf32>
    %129 = arith.addf %127, %128 : vector<11x1xf32>
    %130 = math.rsqrt %129 : vector<11x1xf32>
    %131 = vector.broadcast %130 : vector<11x1xf32> to vector<11x32xf32>
    %132 = arith.mulf %122, %131 : vector<11x32xf32>
    %133 = vector.broadcast %115 : vector<1x32xf32> to vector<11x32xf32>
    %134 = arith.mulf %132, %133 : vector<11x32xf32>
    %135 = vector.broadcast %116 : vector<1x32xf32> to vector<11x32xf32>
    %136 = arith.addf %134, %135 : vector<11x32xf32>
    %137 = arith.truncf %136 : vector<11x32xf32> to vector<11x32xbf16>
    %c0_53 = arith.constant 0 : index
    %c0_54 = arith.constant 0 : index
    %138 = vector.load %arg10[%c0_53, %c0_54] : memref<32x64xbf16, #tpu.memory_space<vmem>>, vector<32x64xbf16>
    %cst_55 = arith.constant dense<0.000000e+00> : vector<11x64xf32>
    %139 = tpu.matmul %137, %138, %cst_55 {dimension_numbers = #tpu.dot_dimension_numbers<[1], [0], [0], [1], [0, 0, 1, 1], [], []>} : vector<11x32xbf16>, vector<32x64xbf16>, vector<11x64xf32> -> vector<11x64xf32>
    %c0_56 = arith.constant 0 : index
    %c0_57 = arith.constant 0 : index
    %140 = vector.load %arg11[%c0_56, %c0_57] : memref<1x64xf32, #tpu.memory_space<vmem>>, vector<1x64xf32>
    %141 = vector.broadcast %140 : vector<1x64xf32> to vector<11x64xf32>
    %142 = arith.addf %139, %141 : vector<11x64xf32>
    %cst_58 = arith.constant 5.000000e-01 : f32
    %143 = vector.broadcast %cst_58 : f32 to vector<11x64xf32>
    %144 = arith.mulf %143, %142 : vector<11x64xf32>
    %cst_59 = arith.constant 4.471500e-02 : f32
    %145 = vector.broadcast %cst_59 : f32 to vector<11x64xf32>
    %146 = arith.mulf %145, %142 : vector<11x64xf32>
    %147 = arith.mulf %146, %142 : vector<11x64xf32>
    %148 = arith.mulf %147, %142 : vector<11x64xf32>
    %149 = arith.addf %142, %148 : vector<11x64xf32>
    %cst_60 = arith.constant 0.797884583 : f32
    %150 = vector.broadcast %cst_60 : f32 to vector<11x64xf32>
    %151 = arith.mulf %150, %149 : vector<11x64xf32>
    %152 = math.tanh %151 : vector<11x64xf32>
    %cst_61 = arith.constant 1.000000e+00 : f32
    %153 = vector.broadcast %cst_61 : f32 to vector<11x64xf32>
    %154 = arith.addf %153, %152 : vector<11x64xf32>
    %155 = arith.mulf %144, %154 : vector<11x64xf32>
    %156 = arith.truncf %155 : vector<11x64xf32> to vector<11x64xbf16>
    %c0_62 = arith.constant 0 : index
    %c0_63 = arith.constant 0 : index
    %157 = vector.load %arg12[%c0_62, %c0_63] : memref<64x32xbf16, #tpu.memory_space<vmem>>, vector<64x32xbf16>
    %cst_64 = arith.constant dense<0.000000e+00> : vector<11x32xf32>
    %158 = tpu.matmul %156, %157, %cst_64 {dimension_numbers = #tpu.dot_dimension_numbers<[1], [0], [0], [1], [0, 0, 1, 1], [], []>} : vector<11x64xbf16>, vector<64x32xbf16>, vector<11x32xf32> -> vector<11x32xf32>
    %c0_65 = arith.constant 0 : index
    %c0_66 = arith.constant 0 : index
    %159 = vector.load %arg13[%c0_65, %c0_66] : memref<1x32xf32, #tpu.memory_space<vmem>>, vector<1x32xf32>
    %160 = vector.broadcast %159 : vector<1x32xf32> to vector<11x32xf32>
    %161 = arith.addf %158, %160 : vector<11x32xf32>
    %162 = arith.addf %114, %161 : vector<11x32xf32>
    %163 = arith.truncf %162 : vector<11x32xf32> to vector<11x32xbf16>
    %c0_67 = arith.constant 0 : index
    %c0_68 = arith.constant 0 : index
    %c0_69 = arith.constant 0 : index
    %164 = vector.load %arg14[%c0_67, %c0_68, %c0_69] : memref<1x11x32xbf16, #tpu.memory_space<vmem>>, vector<1x11x32xbf16>
    %165 = vector.shape_cast %164 : vector<1x11x32xbf16> to vector<11x32xbf16>
    %166 = vector.shape_cast %163 : vector<11x32xbf16> to vector<1x11x32xbf16>
    tpu.vector_store %arg14[%c0_67, %c0_68, %c0_69], %166 {strides = array<i32>} : memref<1x11x32xbf16, #tpu.memory_space<vmem>>, vector<1x11x32xbf16>,
    return
  }
  func.func @transform_0(%arg0: i32) -> (i32, i32, i32) {
    %c0_i32 = arith.constant 0 : i32
    %c0_i32_0 = arith.constant 0 : i32
    %c0_i32_1 = arith.constant 0 : i32
    return %arg0, %c0_i32, %c0_i32_0 : i32, i32, i32
  }
  func.func @transform_1(%arg0: i32) -> (i32, i32) {
    %c0_i32 = arith.constant 0 : i32
    %c0_i32_0 = arith.constant 0 : i32
    %c0_i32_1 = arith.constant 0 : i32
    return %c0_i32, %c0_i32_0 : i32, i32
  }
  func.func @transform_2(%arg0: i32) -> (i32, i32) {
    %c0_i32 = arith.constant 0 : i32
    %c0_i32_0 = arith.constant 0 : i32
    %c0_i32_1 = arith.constant 0 : i32
    return %c0_i32, %c0_i32_0 : i32, i32
  }
  func.func @transform_3(%arg0: i32) -> (i32, i32) {
    %c0_i32 = arith.constant 0 : i32
    %c0_i32_0 = arith.constant 0 : i32
    %c0_i32_1 = arith.constant 0 : i32
    return %c0_i32, %c0_i32_0 : i32, i32
  }
  func.func @transform_4(%arg0: i32) -> (i32, i32) {
    %c0_i32 = arith.constant 0 : i32
    %c0_i32_0 = arith.constant 0 : i32
    %c0_i32_1 = arith.constant 0 : i32
    return %c0_i32, %c0_i32_0 : i32, i32
  }
  func.func @transform_5(%arg0: i32) -> (i32, i32) {
    %c0_i32 = arith.constant 0 : i32
    %c0_i32_0 = arith.constant 0 : i32
    %c0_i32_1 = arith.constant 0 : i32
    return %c0_i32, %c0_i32_0 : i32, i32
  }
  func.func @transform_6(%arg0: i32) -> (i32, i32) {
    %c0_i32 = arith.constant 0 : i32
    %c0_i32_0 = arith.constant 0 : i32
    %c0_i32_1 = arith.constant 0 : i32
    return %c0_i32, %c0_i32_0 : i32, i32
  }
  func.func @transform_7(%arg0: i32) -> (i32, i32) {
    %c0_i32 = arith.constant 0 : i32
    %c0_i32_0 = arith.constant 0 : i32
    %c0_i32_1 = arith.constant 0 : i32
    return %c0_i32, %c0_i32_0 : i32, i32
  }
  func.func @transform_8(%arg0: i32) -> (i32, i32) {
    %c0_i32 = arith.constant 0 : i32
    %c0_i32_0 = arith.constant 0 : i32
    %c0_i32_1 = arith.constant 0 : i32
    return %c0_i32, %c0_i32_0 : i32, i32
  }
  func.func @transform_9(%arg0: i32) -> (i32, i32) {
    %c0_i32 = arith.constant 0 : i32
    %c0_i32_0 = arith.constant 0 : i32
    %c0_i32_1 = arith.constant 0 : i32
    return %c0_i32, %c0_i32_0 : i32, i32
  }
  func.func @transform_10(%arg0: i32) -> (i32, i32) {
    %c0_i32 = arith.constant 0 : i32
    %c0_i32_0 = arith.constant 0 : i32
    %c0_i32_1 = arith.constant 0 : i32
    return %c0_i32, %c0_i32_0 : i32, i32
  }
  func.func @transform_11(%arg0: i32) -> (i32, i32) {
    %c0_i32 = arith.constant 0 : i32
    %c0_i32_0 = arith.constant 0 : i32
    %c0_i32_1 = arith.constant 0 : i32
    return %c0_i32, %c0_i32_0 : i32, i32
  }
  func.func @transform_12(%arg0: i32) -> (i32, i32) {
    %c0_i32 = arith.constant 0 : i32
    %c0_i32_0 = arith.constant 0 : i32
    %c0_i32_1 = arith.constant 0 : i32
    return %c0_i32, %c0_i32_0 : i32, i32
  }
  func.func @transform_13(%arg0: i32) -> (i32, i32, i32) {
    %c0_i32 = arith.constant 0 : i32
    %c0_i32_0 = arith.constant 0 : i32
    %c0_i32_1 = arith.constant 0 : i32
    return %arg0, %c0_i32, %c0_i32_0 : i32, i32, i32
  }
}

module attributes {stable_mosaic.version = 11 : i64} {
  func.func @_pool_kernel(%arg0: i32, %arg1: memref<1x8x32xbf16, #tpu.memory_space<vmem>>, %arg2: memref<1x32xf32, #tpu.memory_space<vmem>>, %arg3: memref<1x32xf32, #tpu.memory_space<vmem>>, %arg4: memref<1x1x32xf32, #tpu.memory_space<vmem>>) attributes {dimension_semantics = [#tpu.dimension_semantics<parallel>], iteration_bounds = array<i64: 2>, scalar_prefetch = 0 : i64, scratch_operands = 0 : i64, tpu.core_type = #tpu.core_type<tc>, window_params = [{transform_indices = @transform_0, window_bounds = array<i64: 1, 8, 32>}, {pipeline_mode = #tpu.pipeline_mode<synchronous>, transform_indices = @transform_1, window_bounds = array<i64: 1, 32>}, {pipeline_mode = #tpu.pipeline_mode<synchronous>, transform_indices = @transform_2, window_bounds = array<i64: 1, 32>}, {transform_indices = @transform_3, window_bounds = array<i64: 1, 1, 32>}]} {
    %c0 = arith.constant 0 : index
    %c0_0 = arith.constant 0 : index
    %c0_1 = arith.constant 0 : index
    %0 = vector.load %arg1[%c0, %c0_0, %c0_1] : memref<1x8x32xbf16, #tpu.memory_space<vmem>>, vector<1x8x32xbf16>
    %1 = vector.shape_cast %0 : vector<1x8x32xbf16> to vector<8x32xbf16>
    %2 = vector.extract_strided_slice %1 {offsets = [0, 0], sizes = [2, 32], strides = [1, 1]} : vector<8x32xbf16> to vector<2x32xbf16>
    %3 = arith.extf %2 : vector<2x32xbf16> to vector<2x32xf32>
    %c0_2 = arith.constant 0 : index
    %c0_3 = arith.constant 0 : index
    %4 = vector.load %arg2[%c0_2, %c0_3] : memref<1x32xf32, #tpu.memory_space<vmem>>, vector<1x32xf32>
    %c0_4 = arith.constant 0 : index
    %c0_5 = arith.constant 0 : index
    %5 = vector.load %arg3[%c0_4, %c0_5] : memref<1x32xf32, #tpu.memory_space<vmem>>, vector<1x32xf32>
    %cst = arith.constant dense<0.000000e+00> : vector<2xf32>
    %6 = vector.multi_reduction <add>, %3, %cst [1] : vector<2x32xf32> to vector<2xf32>
    %7 = vector.shape_cast %6 : vector<2xf32> to vector<2x1xf32>
    %cst_6 = arith.constant 3.200000e+01 : f32
    %8 = vector.broadcast %cst_6 : f32 to vector<2x1xf32>
    %9 = arith.divf %7, %8 : vector<2x1xf32>
    %10 = vector.broadcast %9 : vector<2x1xf32> to vector<2x32xf32>
    %11 = arith.subf %3, %10 : vector<2x32xf32>
    %12 = arith.mulf %11, %11 : vector<2x32xf32>
    %cst_7 = arith.constant dense<0.000000e+00> : vector<2xf32>
    %13 = vector.multi_reduction <add>, %12, %cst_7 [1] : vector<2x32xf32> to vector<2xf32>
    %14 = vector.shape_cast %13 : vector<2xf32> to vector<2x1xf32>
    %cst_8 = arith.constant 3.200000e+01 : f32
    %15 = vector.broadcast %cst_8 : f32 to vector<2x1xf32>
    %16 = arith.divf %14, %15 : vector<2x1xf32>
    %cst_9 = arith.constant 9.99999996E-13 : f32
    %17 = vector.broadcast %cst_9 : f32 to vector<2x1xf32>
    %18 = arith.addf %16, %17 : vector<2x1xf32>
    %19 = math.rsqrt %18 : vector<2x1xf32>
    %20 = vector.broadcast %19 : vector<2x1xf32> to vector<2x32xf32>
    %21 = arith.mulf %11, %20 : vector<2x32xf32>
    %22 = vector.broadcast %4 : vector<1x32xf32> to vector<2x32xf32>
    %23 = arith.mulf %21, %22 : vector<2x32xf32>
    %24 = vector.broadcast %5 : vector<1x32xf32> to vector<2x32xf32>
    %25 = arith.addf %23, %24 : vector<2x32xf32>
    %26 = vector.extract_strided_slice %25 {offsets = [0, 0], sizes = [1, 32], strides = [1, 1]} : vector<2x32xf32> to vector<1x32xf32>
    %27 = vector.extract_strided_slice %25 {offsets = [1, 0], sizes = [1, 32], strides = [1, 1]} : vector<2x32xf32> to vector<1x32xf32>
    %28 = arith.addf %26, %27 : vector<1x32xf32>
    %cst_10 = arith.constant 5.000000e-01 : f32
    %29 = vector.broadcast %cst_10 : f32 to vector<1x32xf32>
    %30 = arith.mulf %29, %28 : vector<1x32xf32>
    %c0_11 = arith.constant 0 : index
    %c0_12 = arith.constant 0 : index
    %c0_13 = arith.constant 0 : index
    %31 = vector.load %arg4[%c0_11, %c0_12, %c0_13] : memref<1x1x32xf32, #tpu.memory_space<vmem>>, vector<1x1x32xf32>
    %32 = vector.shape_cast %31 : vector<1x1x32xf32> to vector<1x32xf32>
    %33 = vector.shape_cast %30 : vector<1x32xf32> to vector<1x1x32xf32>
    tpu.vector_store %arg4[%c0_11, %c0_12, %c0_13], %33 {strides = array<i32>} : memref<1x1x32xf32, #tpu.memory_space<vmem>>, vector<1x1x32xf32>,
    return
  }
  func.func @transform_0(%arg0: i32) -> (i32, i32, i32) {
    %c0_i32 = arith.constant 0 : i32
    %c0_i32_0 = arith.constant 0 : i32
    %c0_i32_1 = arith.constant 0 : i32
    return %arg0, %c0_i32, %c0_i32_0 : i32, i32, i32
  }
  func.func @transform_1(%arg0: i32) -> (i32, i32) {
    %c0_i32 = arith.constant 0 : i32
    %c0_i32_0 = arith.constant 0 : i32
    %c0_i32_1 = arith.constant 0 : i32
    return %c0_i32, %c0_i32_0 : i32, i32
  }
  func.func @transform_2(%arg0: i32) -> (i32, i32) {
    %c0_i32 = arith.constant 0 : i32
    %c0_i32_0 = arith.constant 0 : i32
    %c0_i32_1 = arith.constant 0 : i32
    return %c0_i32, %c0_i32_0 : i32, i32
  }
  func.func @transform_3(%arg0: i32) -> (i32, i32, i32) {
    %c0_i32 = arith.constant 0 : i32
    %c0_i32_0 = arith.constant 0 : i32
    %c0_i32_1 = arith.constant 0 : i32
    return %arg0, %c0_i32, %c0_i32_0 : i32, i32, i32
  }
}

</mosaic_0001>

<llo_original>
// kernel: _lambda_.4
$region0: #{_lambda_.4}
  #allocation0 [shape = 'u32[]', space=smem, size = 0x4, offset = 0x4, fixed_abs, tag = 'smem constant byte address 0x4 - core index']
  #allocation1 [shape = 'u32[144,128]{1,0:T(1,128)}', space=vmem, size = 0x12000, scoped, tag = 'internal scratch']
  %s0 = inlined_call_operand.vmem [shape: bf16[2,9,256], index: 0, kind: input, shape index: {}]
  %s1 = inlined_call_operand.vmem [shape: bf16[256,32], index: 1, kind: input, shape index: {}]
  %s2 = inlined_call_operand.vmem [shape: f32[1,32], index: 2, kind: input, shape index: {}]
  %s3 = inlined_call_operand.vmem [shape: f32[2,32], index: 3, kind: input, shape index: {}]
  %s4 = inlined_call_operand.vmem [shape: f32[9,32], index: 4, kind: input, shape index: {}]
  %s5 = inlined_call_operand.vmem [shape: bf16[2,11,32], index: 5, kind: output, shape index: {}]
  %s6 = sld [smem:[#allocation0]]
  $region53: #{_lambda_.4} parent=0
    _
  %s8 = ssub.s32 1, %s6
  %s9 = scalar_select 0, %s8, %s6
  loop: start=0, step=1, limit=4
  $region2: #{_lambda_.4} parent=0 // loop_pre_header
    _
  $region3: #{_lambda_.4} parent=0 // loop_header
    %s11 = sphi 0, %s15
    %p12 = scmp.ge.s32.totalorder %s11, 4
    %s21 = sphi 0, %s23
    %s24 = sphi 0, %s21
    %s25 = sphi 0, %s24
    %s41 = sphi 0, %s25
    %s45 = sphi 0, %s45
    %s47 = sphi 0, %s45
    %s48 = sphi 0, %s47
    %s62 = sphi 0, %s48
    %s66 = sphi 0, %s66
    %s68 = sphi 0, %s66
    %s69 = sphi 0, %s68
    %s83 = sphi 0, %s69
    %s87 = sphi 0, %s87
    %s89 = sphi 0, %s87
    %s90 = sphi 0, %s89
    %s104 = sphi 0, %s90
    %s108 = sphi 0, %s108
    %s110 = sphi 0, %s108
    %s111 = sphi 0, %s110
    %s125 = sphi 0, %s111
    %s131 = sphi 0, %s133
    %s134 = sphi 0, %s131
    %s135 = sphi 0, %s134
    %s151 = sphi 0, %s135
  $region4: #{_lambda_.4} parent=0 // loop_header_branch
    %14 = sbr.rel (%p12) target = $region8
  $region5: #{_lambda_.4} parent=0 // loop_body
    %s16 = ssub.s32 %s11, 1
    %s17 = ssub.s32 %s11, 2
    %s18 = sadd.s32 %s11, 1
    %s19 = ssub.s32 %s11, %s18
    %p20 = scmp.eq.s32.totalorder %s19, 0
    %s22 = sadd.s32 %s21, 1
    %s23 = scalar_select %p20, %s21, %s22
    %p26 = pneg %p20
    %p27 = scmp.eq.s32.totalorder %s11, 1
    %p28 = por %p26, %p27
    %p29 = scmp.ne.s32.totalorder %s21, %s24
    %p30 = scmp.eq.s32.totalorder %s11, 0
    %p31 = por %p29, %p30
    %p32 = scmp.ne.s32.totalorder %s21, %s24
    %p33 = scmp.eq.s32.totalorder %s16, 1
    %p34 = por %p32, %p33
    %p35 = scmp.ne.s32.totalorder %s24, %s25
    %p36 = scmp.eq.s32.totalorder %s16, 0
    %p37 = por %p35, %p36
    %p38 = scmp.ne.s32.totalorder %s24, %s25
    %p39 = scmp.eq.s32.totalorder %s17, 1
    %p40 = por %p38, %p39
    %p42 = scmp.ne.s32.totalorder %s25, %s41
    %p43 = scmp.eq.s32.totalorder %s17, 0
    %p44 = por %p42, %p43
    %s46 = sadd.s32 %s45, 1
    %p49 = scmp.eq.s32.totalorder %s11, 1
    %p50 = scmp.ne.s32.totalorder %s45, %s47
    %p51 = scmp.eq.s32.totalorder %s11, 0
    %p52 = por %p50, %p51
    %p53 = scmp.ne.s32.totalorder %s45, %s47
    %p54 = scmp.eq.s32.totalorder %s16, 1
    %p55 = por %p53, %p54
    %p56 = scmp.ne.s32.totalorder %s47, %s48
    %p57 = scmp.eq.s32.totalorder %s16, 0
    %p58 = por %p56, %p57
    %p59 = scmp.ne.s32.totalorder %s47, %s48
    %p60 = scmp.eq.s32.totalorder %s17, 1
    %p61 = por %p59, %p60
    %p63 = scmp.ne.s32.totalorder %s48, %s62
    %p64 = scmp.eq.s32.totalorder %s17, 0
    %p65 = por %p63, %p64
    %s67 = sadd.s32 %s66, 1
    %p70 = scmp.eq.s32.totalorder %s11, 1
    %p71 = scmp.ne.s32.totalorder %s66, %s68
    %p72 = scmp.eq.s32.totalorder %s11, 0
    %p73 = por %p71, %p72
    %p74 = scmp.ne.s32.totalorder %s66, %s68
    %p75 = scmp.eq.s32.totalorder %s16, 1
    %p76 = por %p74, %p75
    %p77 = scmp.ne.s32.totalorder %s68, %s69
    %p78 = scmp.eq.s32.totalorder %s16, 0
    %p79 = por %p77, %p78
    %p80 = scmp.ne.s32.totalorder %s68, %s69
    %p81 = scmp.eq.s32.totalorder %s17, 1
    %p82 = por %p80, %p81
    %p84 = scmp.ne.s32.totalorder %s69, %s83
    %p85 = scmp.eq.s32.totalorder %s17, 0
    %p86 = por %p84, %p85
    %s88 = sadd.s32 %s87, 1
    %p91 = scmp.eq.s32.totalorder %s11, 1
    %p92 = scmp.ne.s32.totalorder %s87, %s89
    %p93 = scmp.eq.s32.totalorder %s11, 0
    %p94 = por %p92, %p93
    %p95 = scmp.ne.s32.totalorder %s87, %s89
    %p96 = scmp.eq.s32.totalorder %s16, 1
    %p97 = por %p95, %p96
    %p98 = scmp.ne.s32.totalorder %s89, %s90
    %p99 = scmp.eq.s32.totalorder %s16, 0
    %p100 = por %p98, %p99
    %p101 = scmp.ne.s32.totalorder %s89, %s90
    %p102 = scmp.eq.s32.totalorder %s17, 1
    %p103 = por %p101, %p102
    %p105 = scmp.ne.s32.totalorder %s90, %s104
    %p106 = scmp.eq.s32.totalorder %s17, 0
    %p107 = por %p105, %p106
    %s109 = sadd.s32 %s108, 1
    %p112 = scmp.eq.s32.totalorder %s11, 1
    %p113 = scmp.ne.s32.totalorder %s108, %s110
    %p114 = scmp.eq.s32.totalorder %s11, 0
    %p115 = por %p113, %p114
    %p116 = scmp.ne.s32.totalorder %s108, %s110
    %p117 = scmp.eq.s32.totalorder %s16, 1
    %p118 = por %p116, %p117
    %p119 = scmp.ne.s32.totalorder %s110, %s111
    %p120 = scmp.eq.s32.totalorder %s16, 0
    %p121 = por %p119, %p120
    %p122 = scmp.ne.s32.totalorder %s110, %s111
    %p123 = scmp.eq.s32.totalorder %s17, 1
    %p124 = por %p122, %p123
    %p126 = scmp.ne.s32.totalorder %s111, %s125
    %p127 = scmp.eq.s32.totalorder %s17, 0
    %p128 = por %p126, %p127
    %s129 = ssub.s32 %s11, %s18
    %p130 = scmp.eq.s32.totalorder %s129, 0
    %s132 = sadd.s32 %s131, 1
    %s133 = scalar_select %p130, %s131, %s132
    %p136 = pneg %p130
    %p137 = scmp.eq.s32.totalorder %s11, 1
    %p138 = por %p136, %p137
    %p139 = scmp.ne.s32.totalorder %s131, %s134
    %p140 = scmp.eq.s32.totalorder %s11, 0
    %p141 = por %p139, %p140
    %p142 = scmp.ne.s32.totalorder %s131, %s134
    %p143 = scmp.eq.s32.totalorder %s16, 1
    %p144 = por %p142, %p143
    %p145 = scmp.ne.s32.totalorder %s134, %s135
    %p146 = scmp.eq.s32.totalorder %s16, 0
    %p147 = por %p145, %p146
    %p148 = scmp.ne.s32.totalorder %s134, %s135
    %p149 = scmp.eq.s32.totalorder %s17, 1
    %p150 = por %p148, %p149
    %p152 = scmp.ne.s32.totalorder %s135, %s151
    %p153 = scmp.eq.s32.totalorder %s17, 0
    %p154 = por %p152, %p153
    %p155 = scmp.le.s32.totalorder 1, %s11
    %p156 = scmp.lt.s32.totalorder %s11, 3
    %p157 = pnand %p155, %p156
    %p158 = pneg %p157
    // Predicated region
    $region9: #{_lambda_.4} parent=5 // pred_check
      _
    $region10: #{_lambda_.4} parent=5 // pred_check_branch
      %160 = sbr.rel (%p157) target = $region12
    $region11: #{_lambda_.4} parent=5 // pred_region
      %s161 = ssub.s32 %s11, 1
      // Predicated region
      $region13: #{_lambda_.4} parent=11 // pred_check
        %p162 = pneg %p58
      $region14: #{_lambda_.4} parent=11 // pred_check_branch
        %164 = sbr.rel (%p162) target = $region16
      $region15: #{_lambda_.4} parent=11 // pred_region
        _
      $region16: #{_lambda_.4} parent=11 // pred_fallthru
        _
      // Predicated region
      $region17: #{_lambda_.4} parent=11 // pred_check
        %p165 = pneg %p79
      $region18: #{_lambda_.4} parent=11 // pred_check_branch
        %167 = sbr.rel (%p165) target = $region20
      $region19: #{_lambda_.4} parent=11 // pred_region
        _
      $region20: #{_lambda_.4} parent=11 // pred_fallthru
        _
      // Predicated region
      $region21: #{_lambda_.4} parent=11 // pred_check
        %p168 = pneg %p100
      $region22: #{_lambda_.4} parent=11 // pred_check_branch
        %170 = sbr.rel (%p168) target = $region24
      $region23: #{_lambda_.4} parent=11 // pred_region
        _
      $region24: #{_lambda_.4} parent=11 // pred_fallthru
        _
      // Predicated region
      $region25: #{_lambda_.4} parent=11 // pred_check
        %p171 = pneg %p121
      $region26: #{_lambda_.4} parent=11 // pred_check_branch
        %173 = sbr.rel (%p171) target = $region28
      $region27: #{_lambda_.4} parent=11 // pred_region
        _
      $region28: #{_lambda_.4} parent=11 // pred_fallthru
        _
    $region12: #{_lambda_.4} parent=5 // pred_fallthru
      _
    %p174 = scmp.lt.s32.totalorder %s11, 2
    // Predicated region
    $region29: #{_lambda_.4} parent=5 // pred_check
      %p175 = pneg %p174
    $region30: #{_lambda_.4} parent=5 // pred_check_branch
      %177 = sbr.rel (%p175) target = $region32
    $region31: #{_lambda_.4} parent=5 // pred_region
      // Predicated region
      $region33: #{_lambda_.4} parent=31 // pred_check
        %p178 = pneg %p31
      $region34: #{_lambda_.4} parent=31 // pred_check_branch
        %180 = sbr.rel (%p178) target = $region36
      $region35: #{_lambda_.4} parent=31 // pred_region
        %p181 = scmp.lt.s32.totalorder %s11, 1
        %s182 = scalar_select %p181, %s11, 1
        %s183 = smul.addr %s182, 4
        %s184 = smul.addr %s183, 4
        %s185 = scalar_lea.vmem %s0, %s184
      $region36: #{_lambda_.4} parent=31 // pred_fallthru
        _
    $region32: #{_lambda_.4} parent=5 // pred_fallthru
      _
    %p186 = scmp.le.s32.totalorder 1, %s11
    %p187 = scmp.lt.s32.totalorder %s11, 3
    %p188 = pnand %p186, %p187
    %p189 = pneg %p188
    // Predicated region
    $region37: #{_lambda_.4} parent=5 // pred_check
      _
    $region38: #{_lambda_.4} parent=5 // pred_check_branch
      %191 = sbr.rel (%p188) target = $region40
    $region39: #{_lambda_.4} parent=5 // pred_region
      %s192 = ssub.s32 %s11, 1
      %p193 = scmp.lt.s32.totalorder %s16, 1
      %s194 = scalar_select %p193, %s16, 1
      %s195 = smul.addr %s194, 4
      %s196 = smul.addr %s195, 4
      %s197 = scalar_lea.vmem %s0, %s196
      %p198 = pneg %p37
      %p199 = pneg %p34
      %p200 = pneg %p58
      %p201 = pneg %p55
      %p202 = pneg %p79
      %p203 = pneg %p76
      %p204 = pneg %p100
      %p205 = pneg %p97
      %p206 = pneg %p121
      %p207 = pneg %p118
      %p208 = pneg %p147
      %p209 = pneg %p144
      %p210 = scmp.lt.s32.totalorder %s16, 1
      %s211 = scalar_select %p210, %s16, 1
      %s212 = smul.addr %s211, 2
      %s213 = smul.addr %s212, 4
      %s214 = scalar_lea.vmem %s5, %s213
      %p215 = scmp.lt.s32.totalorder %s16, 1
      %s216 = scalar_select %p215, %s16, 1
      %s217 = smul.addr %s216, 4
      %s218 = smul.addr %s217, 4
      %s219 = scalar_lea.vmem %s0, %s218
      %p220 = scmp.lt.s32.totalorder %s16, 1
      %s221 = scalar_select %p220, %s16, 1
      %s222 = smul.addr %s221, 2
      %s223 = smul.addr %s222, 4
      %s224 = scalar_lea.vmem %s5, %s223
      %v226 = vld [vmem:[%s219] sm:$0xff]
      %v227 = vld [vmem:[%s219 + $0x8] sm:$0x11]
      %v228 = vld [vmem:[%s1] sm:$0xf]
      %v229 = vld [vmem:[%s1 + $0x4] sm:$0xf]
      %v230 = vld [vmem:[%s1 + $0x8] sm:$0xf]
      %v231 = vld [vmem:[%s1 + $0xc] sm:$0xf]
      %v232 = vld [vmem:[%s1 + $0x10] sm:$0xf]
      %v233 = vld [vmem:[%s1 + $0x14] sm:$0xf]
      %v234 = vld [vmem:[%s1 + $0x18] sm:$0xf]
      %v235 = vld [vmem:[%s1 + $0x1c] sm:$0xf]
      %v236 = vld [vmem:[%s1 + $0x20] sm:$0xf]
      %v237 = vld [vmem:[%s1 + $0x24] sm:$0xf]
      %v238 = vld [vmem:[%s1 + $0x28] sm:$0xf]
      %v239 = vld [vmem:[%s1 + $0x2c] sm:$0xf]
      %v240 = vld [vmem:[%s1 + $0x30] sm:$0xf]
      %v241 = vld [vmem:[%s1 + $0x34] sm:$0xf]
      %v242 = vld [vmem:[%s1 + $0x38] sm:$0xf]
      %v243 = vld [vmem:[%s1 + $0x3c] sm:$0xf]
      %v244 = vld [vmem:[%s1 + $0x40] sm:$0xf]
      %v245 = vld [vmem:[%s1 + $0x44] sm:$0xf]
      %v246 = vld [vmem:[%s1 + $0x48] sm:$0xf]
      %v247 = vld [vmem:[%s1 + $0x4c] sm:$0xf]
      %v248 = vld [vmem:[%s1 + $0x50] sm:$0xf]
      %v249 = vld [vmem:[%s1 + $0x54] sm:$0xf]
      %v250 = vld [vmem:[%s1 + $0x58] sm:$0xf]
      %v251 = vld [vmem:[%s1 + $0x5c] sm:$0xf]
      %v252 = vld [vmem:[%s1 + $0x60] sm:$0xf]
      %v253 = vld [vmem:[%s1 + $0x64] sm:$0xf]
      %v254 = vld [vmem:[%s1 + $0x68] sm:$0xf]
      %v255 = vld [vmem:[%s1 + $0x6c] sm:$0xf]
      %v256 = vld [vmem:[%s1 + $0x70] sm:$0xf]
      %v257 = vld [vmem:[%s1 + $0x74] sm:$0xf]
      %v258 = vld [vmem:[%s1 + $0x78] sm:$0xf]
      %v259 = vld [vmem:[%s1 + $0x7c] sm:$0xf]
      %v260 = vld [vmem:[%s2] sm:$0x1]
      %v262 = vlaneseq
      %v263 = vshrl.u32 %v262, 7
      %v264 = vsub.s32 0, %v263
      %v265 = vrot.slane %v260, %v264
      %v269 = vunpack.c.l.b16 %v226
      %v270 = vunpack.c.h.b16 %v226
      %v271 = vunpack.c.l.b16 %v227
      %v272 = vunpack.c.h.b16 %v227
      %v273 = vpack.c.b16 %v271, %v269
      %v274 = vpack.c.b16 %v272, %v270
      %v309 = vunpack.c.l.b16 %v228
      %v310 = vunpack.c.l.b16 %v229
      %v311 = vunpack.c.l.b16 %v230
      %v312 = vunpack.c.l.b16 %v231
      %v313 = vunpack.c.l.b16 %v232
      %v314 = vunpack.c.l.b16 %v233
      %v315 = vunpack.c.l.b16 %v234
      %v316 = vunpack.c.l.b16 %v235
      %v317 = vunpack.c.l.b16 %v236
      %v318 = vunpack.c.l.b16 %v237
      %v319 = vunpack.c.l.b16 %v238
      %v320 = vunpack.c.l.b16 %v239
      %v321 = vunpack.c.l.b16 %v240
      %v322 = vunpack.c.l.b16 %v241
      %v323 = vunpack.c.l.b16 %v242
      %v324 = vunpack.c.l.b16 %v243
      %v325 = vunpack.c.l.b16 %v244
      %v326 = vunpack.c.l.b16 %v245
      %v327 = vunpack.c.l.b16 %v246
      %v328 = vunpack.c.l.b16 %v247
      %v329 = vunpack.c.l.b16 %v248
      %v330 = vunpack.c.l.b16 %v249
      %v331 = vunpack.c.l.b16 %v250
      %v332 = vunpack.c.l.b16 %v251
      %v333 = vunpack.c.l.b16 %v252
      %v334 = vunpack.c.l.b16 %v253
      %v335 = vunpack.c.l.b16 %v254
      %v336 = vunpack.c.l.b16 %v255
      %v337 = vunpack.c.l.b16 %v256
      %v338 = vunpack.c.l.b16 %v257
      %v339 = vunpack.c.l.b16 %v258
      %v340 = vunpack.c.l.b16 %v259
      %v341 = vpack.c.b16 %v310, %v309
      %v342 = vpack.c.b16 %v312, %v311
      %v343 = vpack.c.b16 %v314, %v313
      %v344 = vpack.c.b16 %v316, %v315
      %v345 = vpack.c.b16 %v318, %v317
      %v346 = vpack.c.b16 %v320, %v319
      %v347 = vpack.c.b16 %v322, %v321
      %v348 = vpack.c.b16 %v324, %v323
      %v349 = vpack.c.b16 %v326, %v325
      %v350 = vpack.c.b16 %v328, %v327
      %v351 = vpack.c.b16 %v330, %v329
      %v352 = vpack.c.b16 %v332, %v331
      %v353 = vpack.c.b16 %v334, %v333
      %v354 = vpack.c.b16 %v336, %v335
      %v355 = vpack.c.b16 %v338, %v337
      %v356 = vpack.c.b16 %v340, %v339
      %373 = vmatprep.subr.bf16.mxu0 0
      %374 = vmatpush1.bf16.msra.mxu0 %v348
      %375 = vmatprep.subr.bf16.mxu0 0
      %376 = vmatpush1.bf16.msra.mxu0 %v347
      %377 = vmatprep.subr.bf16.mxu0 0
      %378 = vmatpush1.bf16.msra.mxu0 %v346
      %379 = vmatprep.subr.bf16.mxu0 0
      %380 = vmatpush1.bf16.msra.mxu0 %v345
      %381 = vmatprep.subr.bf16.mxu0 0
      %382 = vmatpush1.bf16.msra.mxu0 %v344
      %383 = vmatprep.subr.bf16.mxu0 0
      %384 = vmatpush1.bf16.msra.mxu0 %v343
      %385 = vmatprep.subr.bf16.mxu0 0
      %386 = vmatpush1.bf16.msra.mxu0 %v342
      %387 = vmatprep.subr.bf16.mxu0 0
      %388 = vmatpush1.bf16.msra.mxu0 %v341
      %389 = vmatprep.subr.bf16.mxu0 0
      %390 = vmatpush2.bf16.msra.mxu0 %v356
      %391 = vmatprep.subr.bf16.mxu0 0
      %392 = vmatpush2.bf16.msra.mxu0 %v355
      %393 = vmatprep.subr.bf16.mxu0 0
      %394 = vmatpush2.bf16.msra.mxu0 %v354
      %395 = vmatprep.subr.bf16.mxu0 0
      %396 = vmatpush2.bf16.msra.mxu0 %v353
      %397 = vmatprep.subr.bf16.mxu0 0
      %398 = vmatpush2.bf16.msra.mxu0 %v352
      %399 = vmatprep.subr.bf16.mxu0 0
      %400 = vmatpush2.bf16.msra.mxu0 %v351
      %401 = vmatprep.subr.bf16.mxu0 0
      %402 = vmatpush2.bf16.msra.mxu0 %v350
      %403 = vmatprep.subr.bf16.mxu0 0
      %404 = vmatpush2.bf16.msra.mxu0 %v349
      %405 = vmatprep.mubr.bf16.mxu0 %v274
      %406 = vmatmul.mubr.bf16.gmra.mxu0 %v273
      %v407 = vpop.f32.mrf.mxu0
      %v408 = vadd.f32 %v265, %v407
      %v409 = vpop.f32.mrf.mxu0
      %v410 = vpop.f32.mrf.mxu0
      %v411 = vadd.f32 %v265, %v410
      %v412 = vpop.f32.mrf.mxu0
      %413 = vdwg.mxu0
      %v414 = vld [vmem:[%s3] sm:$0x3]
      %v415 = vpack.c.bf16 %v414, %v414
      %vm416 = vcmask 253952
      %417 = vst.msk [vmem:[%s224] sm:$0x1] %vm416, %v415
      %v418 = vld [vmem:[%s4] sm:$0xff]
      %v419 = vld [vmem:[%s4 + $0x8] sm:$0x1]
      %v420 = vadd.f32 %v408, %v418
      %v421 = vadd.f32 %v411, %v419
      %v422 = vpack.c.bf16 %v421, %v420
      %v424 = vunpack.c.l.b16 %v422
      %v425 = vunpack.c.h.b16 %v422
      %v426 = vpack.c.b16 %v424, %v424
      %v427 = vpack.c.b16 %v425, %v425
      %vm428 = vcmask 1040384
      %vm429 = vcmask 1044484
      %vm430 = vmor %vm428, %vm429
      %v431 = vrot.slane %v426, 7
      %v432 = vrot.slane %v431, 4
      %v433 = vrot.slane %v427, 7
      %v434 = vsel %vm430, %v432, %v433
      %vm437 = vcmask 257025
      %438 = vst.msk [vmem:[%s224] sm:$0xe] %vm437, %v431
      %vm439 = vcmask 254976
      %vm440 = vsmask.f32 1280
      %vm441 = vmand %vm439, %vm440
      %v442 = vld [vmem:[%s224 + $0x4] sm:$0x3]
      %v443 = vsel %vm441, %v434, %v442
      %444 = vst [vmem:[%s224 + $0x4] sm:$0x3] %v443
      %p445 = scmp.lt.s32.totalorder %s16, 1
      %s446 = scalar_select %p445, %s16, 1
      %s447 = smul.addr %s446, 2
      %s448 = smul.addr %s447, 4
      %s449 = scalar_lea.vmem %s5, %s448
      // Predicated region
      $region41: #{_lambda_.4} parent=39 // pred_check
        %p450 = pneg %p144
      $region42: #{_lambda_.4} parent=39 // pred_check_branch
        %452 = sbr.rel (%p450) target = $region44
      $region43: #{_lambda_.4} parent=39 // pred_region
        _
      $region44: #{_lambda_.4} parent=39 // pred_fallthru
        _
    $region40: #{_lambda_.4} parent=5 // pred_fallthru
      _
    %p453 = scmp.le.s32.totalorder 2, %s11
    // Predicated region
    $region45: #{_lambda_.4} parent=5 // pred_check
      %p454 = pneg %p453
    $region46: #{_lambda_.4} parent=5 // pred_check_branch
      %456 = sbr.rel (%p454) target = $region48
    $region47: #{_lambda_.4} parent=5 // pred_region
      %s457 = ssub.s32 %s11, 2
      // Predicated region
      $region49: #{_lambda_.4} parent=47 // pred_check
        %p458 = pneg %p150
      $region50: #{_lambda_.4} parent=47 // pred_check_branch
        %460 = sbr.rel (%p458) target = $region52
      $region51: #{_lambda_.4} parent=47 // pred_region
        %p461 = scmp.lt.s32.totalorder %s17, 1
        %s462 = scalar_select %p461, %s17, 1
        %s463 = smul.addr %s462, 2
        %s464 = smul.addr %s463, 4
        %s465 = scalar_lea.vmem %s5, %s464
      $region52: #{_lambda_.4} parent=47 // pred_fallthru
        _
    $region48: #{_lambda_.4} parent=5 // pred_fallthru
      _
  $region6: #{_lambda_.4} parent=0 // loop_footer
    %s15 = sadd.s32 1, %s11
  $region7: #{_lambda_.4} parent=0 // loop_footer_branch
    %10 = sbr.rel target = $region3
  $region8: #{_lambda_.4} parent=0 // loop_exit
    _

// kernel: _lambda_.7
$region0: #{_lambda_.7}
  #allocation0 [shape = 'u32[]', space=smem, size = 0x4, offset = 0x4, fixed_abs, tag = 'smem constant byte address 0x4 - core index']
  #allocation1 [shape = 'u32[144,128]{1,0:T(1,128)}', space=vmem, size = 0x12000, scoped, tag = 'internal scratch']
  %s0 = inlined_call_operand.vmem [shape: bf16[2,11,32], index: 0, kind: input, shape index: {}]
  %s1 = inlined_call_operand.vmem [shape: f32[1,32], index: 1, kind: input, shape index: {}]
  %s2 = inlined_call_operand.vmem [shape: f32[1,32], index: 2, kind: input, shape index: {}]
  %s3 = inlined_call_operand.hbm [shape: f32[2,1,32], index: 3, kind: output, shape index: {}]
  %s4 = sld [smem:[#allocation0]]
  $region45: #{_lambda_.7} parent=0
    _
  %s6 = ssub.s32 1, %s4
  %s7 = scalar_select 0, %s6, %s4
  $region1: #{_lambda_.7} parent=0
    #allocation2 [shape = 'u8[1024]{0}', space=vmem, size = 0x400, scoped, tag = 'output window, operand 0']
    #allocation3 [shape = 's32[2]{0}', space=sflag, size = 0x8, scoped, tag = 'scoped memory for _lambda_.7']
    %8 = vsyncpa [#allocation3], 0
    %s9 = scalar_lea.sflag [#allocation3], 1
    %10 = vsyncpa %s9, 0
    loop: start=0, step=1, limit=4
    $region2: #{_lambda_.7} parent=1 // loop_pre_header
      _
    $region3: #{_lambda_.7} parent=1 // loop_header
      %s12 = sphi 0, %s16
      %p13 = scmp.ge.s32.totalorder %s12, 4
      %s22 = sphi 0, %s24
      %s25 = sphi 0, %s22
      %s26 = sphi 0, %s25
      %s42 = sphi 0, %s26
      %s46 = sphi 0, %s46
      %s48 = sphi 0, %s46
      %s49 = sphi 0, %s48
      %s63 = sphi 0, %s49
      %s67 = sphi 0, %s67
      %s69 = sphi 0, %s67
      %s70 = sphi 0, %s69
      %s84 = sphi 0, %s70
      %s90 = sphi 0, %s92
      %s93 = sphi 0, %s90
      %s94 = sphi 0, %s93
      %s110 = sphi 0, %s94
    $region4: #{_lambda_.7} parent=1 // loop_header_branch
      %15 = sbr.rel (%p13) target = $region8
    $region5: #{_lambda_.7} parent=1 // loop_body
      %s17 = ssub.s32 %s12, 1
      %s18 = ssub.s32 %s12, 2
      %s19 = sadd.s32 %s12, 1
      %s20 = ssub.s32 %s12, %s19
      %p21 = scmp.eq.s32.totalorder %s20, 0
      %s23 = sadd.s32 %s22, 1
      %s24 = scalar_select %p21, %s22, %s23
      %p27 = pneg %p21
      %p28 = scmp.eq.s32.totalorder %s12, 1
      %p29 = por %p27, %p28
      %p30 = scmp.ne.s32.totalorder %s22, %s25
      %p31 = scmp.eq.s32.totalorder %s12, 0
      %p32 = por %p30, %p31
      %p33 = scmp.ne.s32.totalorder %s22, %s25
      %p34 = scmp.eq.s32.totalorder %s17, 1
      %p35 = por %p33, %p34
      %p36 = scmp.ne.s32.totalorder %s25, %s26
      %p37 = scmp.eq.s32.totalorder %s17, 0
      %p38 = por %p36, %p37
      %p39 = scmp.ne.s32.totalorder %s25, %s26
      %p40 = scmp.eq.s32.totalorder %s18, 1
      %p41 = por %p39, %p40
      %p43 = scmp.ne.s32.totalorder %s26, %s42
      %p44 = scmp.eq.s32.totalorder %s18, 0
      %p45 = por %p43, %p44
      %s47 = sadd.s32 %s46, 1
      %p50 = scmp.eq.s32.totalorder %s12, 1
      %p51 = scmp.ne.s32.totalorder %s46, %s48
      %p52 = scmp.eq.s32.totalorder %s12, 0
      %p53 = por %p51, %p52
      %p54 = scmp.ne.s32.totalorder %s46, %s48
      %p55 = scmp.eq.s32.totalorder %s17, 1
      %p56 = por %p54, %p55
      %p57 = scmp.ne.s32.totalorder %s48, %s49
      %p58 = scmp.eq.s32.totalorder %s17, 0
      %p59 = por %p57, %p58
      %p60 = scmp.ne.s32.totalorder %s48, %s49
      %p61 = scmp.eq.s32.totalorder %s18, 1
      %p62 = por %p60, %p61
      %p64 = scmp.ne.s32.totalorder %s49, %s63
      %p65 = scmp.eq.s32.totalorder %s18, 0
      %p66 = por %p64, %p65
      %s68 = sadd.s32 %s67, 1
      %p71 = scmp.eq.s32.totalorder %s12, 1
      %p72 = scmp.ne.s32.totalorder %s67, %s69
      %p73 = scmp.eq.s32.totalorder %s12, 0
      %p74 = por %p72, %p73
      %p75 = scmp.ne.s32.totalorder %s67, %s69
      %p76 = scmp.eq.s32.totalorder %s17, 1
      %p77 = por %p75, %p76
      %p78 = scmp.ne.s32.totalorder %s69, %s70
      %p79 = scmp.eq.s32.totalorder %s17, 0
      %p80 = por %p78, %p79
      %p81 = scmp.ne.s32.totalorder %s69, %s70
      %p82 = scmp.eq.s32.totalorder %s18, 1
      %p83 = por %p81, %p82
      %p85 = scmp.ne.s32.totalorder %s70, %s84
      %p86 = scmp.eq.s32.totalorder %s18, 0
      %p87 = por %p85, %p86
      %s88 = ssub.s32 %s12, %s19
      %p89 = scmp.eq.s32.totalorder %s88, 0
      %s91 = sadd.s32 %s90, 1
      %s92 = scalar_select %p89, %s90, %s91
      %p95 = pneg %p89
      %p96 = scmp.eq.s32.totalorder %s12, 1
      %p97 = por %p95, %p96
      %p98 = scmp.ne.s32.totalorder %s90, %s93
      %p99 = scmp.eq.s32.totalorder %s12, 0
      %p100 = por %p98, %p99
      %p101 = scmp.ne.s32.totalorder %s90, %s93
      %p102 = scmp.eq.s32.totalorder %s17, 1
      %p103 = por %p101, %p102
      %p104 = scmp.ne.s32.totalorder %s93, %s94
      %p105 = scmp.eq.s32.totalorder %s17, 0
      %p106 = por %p104, %p105
      %p107 = scmp.ne.s32.totalorder %s93, %s94
      %p108 = scmp.eq.s32.totalorder %s18, 1
      %p109 = por %p107, %p108
      %p111 = scmp.ne.s32.totalorder %s94, %s110
      %p112 = scmp.eq.s32.totalorder %s18, 0
      %p113 = por %p111, %p112
      %p114 = scmp.le.s32.totalorder 1, %s12
      %p115 = scmp.lt.s32.totalorder %s12, 3
      %p116 = pnand %p114, %p115
      %p117 = pneg %p116
      // Predicated region
      $region9: #{_lambda_.7} parent=5 // pred_check
        _
      $region10: #{_lambda_.7} parent=5 // pred_check_branch
        %119 = sbr.rel (%p116) target = $region12
      $region11: #{_lambda_.7} parent=5 // pred_region
        %s120 = ssub.s32 %s12, 1
        // Predicated region
        $region13: #{_lambda_.7} parent=11 // pred_check
          %p121 = pneg %p59
        $region14: #{_lambda_.7} parent=11 // pred_check_branch
          %123 = sbr.rel (%p121) target = $region16
        $region15: #{_lambda_.7} parent=11 // pred_region
          _
        $region16: #{_lambda_.7} parent=11 // pred_fallthru
          _
        // Predicated region
        $region17: #{_lambda_.7} parent=11 // pred_check
          %p124 = pneg %p80
        $region18: #{_lambda_.7} parent=11 // pred_check_branch
          %126 = sbr.rel (%p124) target = $region20
        $region19: #{_lambda_.7} parent=11 // pred_region
          _
        $region20: #{_lambda_.7} parent=11 // pred_fallthru
          _
      $region12: #{_lambda_.7} parent=5 // pred_fallthru
        _
      %p127 = scmp.lt.s32.totalorder %s12, 2
      // Predicated region
      $region21: #{_lambda_.7} parent=5 // pred_check
        %p128 = pneg %p127
      $region22: #{_lambda_.7} parent=5 // pred_check_branch
        %130 = sbr.rel (%p128) target = $region24
      $region23: #{_lambda_.7} parent=5 // pred_region
        // Predicated region
        $region25: #{_lambda_.7} parent=23 // pred_check
          %p131 = pneg %p32
        $region26: #{_lambda_.7} parent=23 // pred_check_branch
          %133 = sbr.rel (%p131) target = $region28
        $region27: #{_lambda_.7} parent=23 // pred_region
          %p134 = scmp.lt.s32.totalorder %s12, 1
          %s135 = scalar_select %p134, %s12, 1
          %s136 = smul.addr %s135, 2
          %s137 = smul.addr %s136, 4
          %s138 = scalar_lea.vmem %s0, %s137
        $region28: #{_lambda_.7} parent=23 // pred_fallthru
          _
      $region24: #{_lambda_.7} parent=5 // pred_fallthru
        _
      %p139 = scmp.le.s32.totalorder 1, %s12
      %p140 = scmp.lt.s32.totalorder %s12, 3
      %p141 = pnand %p139, %p140
      %p142 = pneg %p141
      // Predicated region
      $region29: #{_lambda_.7} parent=5 // pred_check
        _
      $region30: #{_lambda_.7} parent=5 // pred_check_branch
        %144 = sbr.rel (%p141) target = $region32
      $region31: #{_lambda_.7} parent=5 // pred_region
        %s145 = ssub.s32 %s12, 1
        %p146 = scmp.lt.s32.totalorder %s17, 1
        %s147 = scalar_select %p146, %s17, 1
        %s148 = smul.addr %s147, 2
        %s149 = smul.addr %s148, 4
        %s150 = scalar_lea.vmem %s0, %s149
        %p151 = pneg %p38
        %p152 = pneg %p35
        %p153 = pneg %p59
        %p154 = pneg %p56
        %p155 = pneg %p80
        %p156 = pneg %p77
        %p157 = pneg %p106
        %p158 = pneg %p103
        %s159 = sand.u32 %s93, 1
        %s160 = scalar_lea.sflag [#allocation3], %s159
        %s161 = sand.u32 %s93, 1
        %s162 = scalar_lea.vmem [#allocation2], %s161
        %p163 = scmp.lt.s32.totalorder %s17, 1
        %s164 = scalar_select %p163, %s17, 1
        %s165 = smul.addr %s164, 2
        %s166 = smul.addr %s165, 4
        %s167 = scalar_lea.vmem %s0, %s166
        %v168 = vld [vmem:[%s167] sm:$0xf]
        %v169 = vunpack.c.l.bf16 %v168
        %v170 = vld [vmem:[%s1] sm:$0x1]
        %v171 = vld [vmem:[%s2] sm:$0x1]
        %vm172 = vcmask 254976
        %v173 = vsel %vm172, %v169, 0.0
        %174 = vadd.xlane.f32.xlu0 %v173
        %v175 = vpop.xlane.xlu0 %174
        %v176 = vrcp.pop 32.0
        %v177 = vmul.f32 %v175, %v176
        %v178 = vsub.f32 %v169, %v177
        %v179 = vmul.f32 %v178, %v178
        %v180 = vsel %vm172, %v179, 0.0
        %181 = vadd.xlane.f32.xlu0 %v180
        %v182 = vpop.xlane.xlu0 %181
        %v183 = vmul.f32 %v182, %v176
        %v184 = vadd.f32 %v183, 1e-12
        %v185 = vrsqrt.pop %v184
        %v186 = vmul.f32 %v178, %v185
        %v188 = vlaneseq
        %v189 = vshrl.u32 %v188, 7
        %v190 = vsub.s32 0, %v189
        %v191 = vrot.slane %v170, %v190
        %v193 = vmul.f32 %v186, %v191
        %v195 = vlaneseq
        %v196 = vshrl.u32 %v195, 7
        %v197 = vsub.s32 0, %v196
        %v198 = vrot.slane %v171, %v197
        %v200 = vadd.f32 %v193, %v198
        %v202 = vrot.slane %v200, 1
        %v204 = vadd.f32 %v200, %v202
        %v205 = vmul.f32 %v204, 0.5
        %vm206 = vcmask 253952
        %207 = vst.msk [vmem:[%s162] sm:$0x1] %vm206, %v205
        %s208 = sand.u32 %s93, 1
        %s209 = scalar_lea.sflag [#allocation3], %s208
        %s210 = sand.u32 %s93, 1
        %s211 = scalar_lea.vmem [#allocation2], %s210
        // Predicated region
        $region33: #{_lambda_.7} parent=31 // pred_check
          %p212 = pneg %p103
        $region34: #{_lambda_.7} parent=31 // pred_check_branch
          %214 = sbr.rel (%p212) target = $region36
        $region35: #{_lambda_.7} parent=31 // pred_region
          %s216 = ssub.s32 16, 16
          %217 = vsyncadd %s209, %s216
          %s218 = smul.addr %s17, 16
          %s219 = scalar_lea.hbm %s3, %s218
          %s221 = sshll.u32 %s211, 4
          %s222 = int_to_ptr.vmem [resolvable:$true] %s221
          %224 = dma.vmem_to_hbm [thread:$0]  %s222, 16, %s219, %s209
        $region36: #{_lambda_.7} parent=31 // pred_fallthru
          _
      $region32: #{_lambda_.7} parent=5 // pred_fallthru
        _
      %p225 = scmp.le.s32.totalorder 2, %s12
      // Predicated region
      $region37: #{_lambda_.7} parent=5 // pred_check
        %p226 = pneg %p225
      $region38: #{_lambda_.7} parent=5 // pred_check_branch
        %228 = sbr.rel (%p226) target = $region40
      $region39: #{_lambda_.7} parent=5 // pred_region
        %s229 = ssub.s32 %s12, 2
        // Predicated region
        $region41: #{_lambda_.7} parent=39 // pred_check
          %p230 = pneg %p109
        $region42: #{_lambda_.7} parent=39 // pred_check_branch
          %232 = sbr.rel (%p230) target = $region44
        $region43: #{_lambda_.7} parent=39 // pred_region
          %s233 = sand.u32 %s94, 1
          %s234 = scalar_lea.sflag [#allocation3], %s233
          %s235 = sand.u32 %s94, 1
          %s236 = scalar_lea.vmem [#allocation2], %s235
          %237 = dma.done %s234, 16
        $region44: #{_lambda_.7} parent=39 // pred_fallthru
          _
      $region40: #{_lambda_.7} parent=5 // pred_fallthru
        _
    $region6: #{_lambda_.7} parent=1 // loop_footer
      %s16 = sadd.s32 1, %s12
    $region7: #{_lambda_.7} parent=1 // loop_footer_branch
      %11 = sbr.rel target = $region3
    $region8: #{_lambda_.7} parent=1 // loop_exit
      _
    %238 = vsyncpa [#allocation3], 1
    %s239 = scalar_lea.sflag [#allocation3], 1
    %240 = vsyncpa %s239, 1

// kernel: _lambda_.5
$region0: #{_lambda_.5}
  #allocation0 [shape = 'u32[]', space=smem, size = 0x4, offset = 0x4, fixed_abs, tag = 'smem constant byte address 0x4 - core index']
  #allocation1 [shape = 'u32[144,128]{1,0:T(1,128)}', space=vmem, size = 0x12000, scoped, tag = 'internal scratch']
  #allocation2 [shape = 'f32[11,32]{1,0:T(8,128)}', space=vmem, size = 0x2000, scoped, tag = 'scratch operand']
  %s0 = inlined_call_operand.vmem [shape: bf16[2,11,32], index: 0, kind: input, shape index: {}, may-alias: {0,13}]
  %s1 = inlined_call_operand.vmem [shape: f32[1,32], index: 1, kind: input, shape index: {}]
  %s2 = inlined_call_operand.vmem [shape: f32[1,32], index: 2, kind: input, shape index: {}]
  %s3 = inlined_call_operand.vmem [shape: bf16[32,96], index: 3, kind: input, shape index: {}]
  %s4 = inlined_call_operand.vmem [shape: f32[1,96], index: 4, kind: input, shape index: {}]
  %s5 = inlined_call_operand.vmem [shape: bf16[32,32], index: 5, kind: input, shape index: {}]
  %s6 = inlined_call_operand.vmem [shape: f32[1,32], index: 6, kind: input, shape index: {}]
  %s7 = inlined_call_operand.vmem [shape: f32[1,32], index: 7, kind: input, shape index: {}]
  %s8 = inlined_call_operand.vmem [shape: f32[1,32], index: 8, kind: input, shape index: {}]
  %s9 = inlined_call_operand.vmem [shape: bf16[32,64], index: 9, kind: input, shape index: {}]
  %s10 = inlined_call_operand.vmem [shape: f32[1,64], index: 10, kind: input, shape index: {}]
  %s11 = inlined_call_operand.vmem [shape: bf16[64,32], index: 11, kind: input, shape index: {}]
  %s12 = inlined_call_operand.vmem [shape: f32[1,32], index: 12, kind: input, shape index: {}]
  %s13 = inlined_call_operand.vmem [shape: bf16[2,11,32], index: 13, kind: output, shape index: {}, may-alias: {0,13}]
  %s14 = sld [smem:[#allocation0]]
  $region85: #{_lambda_.5} parent=0
    _
  %s16 = ssub.s32 1, %s14
  %s17 = scalar_select 0, %s16, %s14
  loop: start=0, step=1, limit=4
  $region2: #{_lambda_.5} parent=0 // loop_pre_header
    _
  $region3: #{_lambda_.5} parent=0 // loop_header
    %s19 = sphi 0, %s23
    %p20 = scmp.ge.s32.totalorder %s19, 4
    %s29 = sphi 0, %s31
    %s32 = sphi 0, %s29
    %s33 = sphi 0, %s32
    %s49 = sphi 0, %s33
    %s53 = sphi 0, %s53
    %s55 = sphi 0, %s53
    %s56 = sphi 0, %s55
    %s70 = sphi 0, %s56
    %s74 = sphi 0, %s74
    %s76 = sphi 0, %s74
    %s77 = sphi 0, %s76
    %s91 = sphi 0, %s77
    %s95 = sphi 0, %s95
    %s97 = sphi 0, %s95
    %s98 = sphi 0, %s97
    %s112 = sphi 0, %s98
    %s116 = sphi 0, %s116
    %s118 = sphi 0, %s116
    %s119 = sphi 0, %s118
    %s133 = sphi 0, %s119
    %s137 = sphi 0, %s137
    %s139 = sphi 0, %s137
    %s140 = sphi 0, %s139
    %s154 = sphi 0, %s140
    %s158 = sphi 0, %s158
    %s160 = sphi 0, %s158
    %s161 = sphi 0, %s160
    %s175 = sphi 0, %s161
    %s179 = sphi 0, %s179
    %s181 = sphi 0, %s179
    %s182 = sphi 0, %s181
    %s196 = sphi 0, %s182
    %s200 = sphi 0, %s200
    %s202 = sphi 0, %s200
    %s203 = sphi 0, %s202
    %s217 = sphi 0, %s203
    %s221 = sphi 0, %s221
    %s223 = sphi 0, %s221
    %s224 = sphi 0, %s223
    %s238 = sphi 0, %s224
    %s242 = sphi 0, %s242
    %s244 = sphi 0, %s242
    %s245 = sphi 0, %s244
    %s259 = sphi 0, %s245
    %s263 = sphi 0, %s263
    %s265 = sphi 0, %s263
    %s266 = sphi 0, %s265
    %s280 = sphi 0, %s266
    %s284 = sphi 0, %s284
    %s286 = sphi 0, %s284
    %s287 = sphi 0, %s286
    %s301 = sphi 0, %s287
    %s307 = sphi 0, %s309
    %s310 = sphi 0, %s307
    %s311 = sphi 0, %s310
    %s327 = sphi 0, %s311
  $region4: #{_lambda_.5} parent=0 // loop_header_branch
    %22 = sbr.rel (%p20) target = $region8
  $region5: #{_lambda_.5} parent=0 // loop_body
    %s24 = ssub.s32 %s19, 1
    %s25 = ssub.s32 %s19, 2
    %s26 = sadd.s32 %s19, 1
    %s27 = ssub.s32 %s19, %s26
    %p28 = scmp.eq.s32.totalorder %s27, 0
    %s30 = sadd.s32 %s29, 1
    %s31 = scalar_select %p28, %s29, %s30
    %p34 = pneg %p28
    %p35 = scmp.eq.s32.totalorder %s19, 1
    %p36 = por %p34, %p35
    %p37 = scmp.ne.s32.totalorder %s29, %s32
    %p38 = scmp.eq.s32.totalorder %s19, 0
    %p39 = por %p37, %p38
    %p40 = scmp.ne.s32.totalorder %s29, %s32
    %p41 = scmp.eq.s32.totalorder %s24, 1
    %p42 = por %p40, %p41
    %p43 = scmp.ne.s32.totalorder %s32, %s33
    %p44 = scmp.eq.s32.totalorder %s24, 0
    %p45 = por %p43, %p44
    %p46 = scmp.ne.s32.totalorder %s32, %s33
    %p47 = scmp.eq.s32.totalorder %s25, 1
    %p48 = por %p46, %p47
    %p50 = scmp.ne.s32.totalorder %s33, %s49
    %p51 = scmp.eq.s32.totalorder %s25, 0
    %p52 = por %p50, %p51
    %s54 = sadd.s32 %s53, 1
    %p57 = scmp.eq.s32.totalorder %s19, 1
    %p58 = scmp.ne.s32.totalorder %s53, %s55
    %p59 = scmp.eq.s32.totalorder %s19, 0
    %p60 = por %p58, %p59
    %p61 = scmp.ne.s32.totalorder %s53, %s55
    %p62 = scmp.eq.s32.totalorder %s24, 1
    %p63 = por %p61, %p62
    %p64 = scmp.ne.s32.totalorder %s55, %s56
    %p65 = scmp.eq.s32.totalorder %s24, 0
    %p66 = por %p64, %p65
    %p67 = scmp.ne.s32.totalorder %s55, %s56
    %p68 = scmp.eq.s32.totalorder %s25, 1
    %p69 = por %p67, %p68
    %p71 = scmp.ne.s32.totalorder %s56, %s70
    %p72 = scmp.eq.s32.totalorder %s25, 0
    %p73 = por %p71, %p72
    %s75 = sadd.s32 %s74, 1
    %p78 = scmp.eq.s32.totalorder %s19, 1
    %p79 = scmp.ne.s32.totalorder %s74, %s76
    %p80 = scmp.eq.s32.totalorder %s19, 0
    %p81 = por %p79, %p80
    %p82 = scmp.ne.s32.totalorder %s74, %s76
    %p83 = scmp.eq.s32.totalorder %s24, 1
    %p84 = por %p82, %p83
    %p85 = scmp.ne.s32.totalorder %s76, %s77
    %p86 = scmp.eq.s32.totalorder %s24, 0
    %p87 = por %p85, %p86
    %p88 = scmp.ne.s32.totalorder %s76, %s77
    %p89 = scmp.eq.s32.totalorder %s25, 1
    %p90 = por %p88, %p89
    %p92 = scmp.ne.s32.totalorder %s77, %s91
    %p93 = scmp.eq.s32.totalorder %s25, 0
    %p94 = por %p92, %p93
    %s96 = sadd.s32 %s95, 1
    %p99 = scmp.eq.s32.totalorder %s19, 1
    %p100 = scmp.ne.s32.totalorder %s95, %s97
    %p101 = scmp.eq.s32.totalorder %s19, 0
    %p102 = por %p100, %p101
    %p103 = scmp.ne.s32.totalorder %s95, %s97
    %p104 = scmp.eq.s32.totalorder %s24, 1
    %p105 = por %p103, %p104
    %p106 = scmp.ne.s32.totalorder %s97, %s98
    %p107 = scmp.eq.s32.totalorder %s24, 0
    %p108 = por %p106, %p107
    %p109 = scmp.ne.s32.totalorder %s97, %s98
    %p110 = scmp.eq.s32.totalorder %s25, 1
    %p111 = por %p109, %p110
    %p113 = scmp.ne.s32.totalorder %s98, %s112
    %p114 = scmp.eq.s32.totalorder %s25, 0
    %p115 = por %p113, %p114
    %s117 = sadd.s32 %s116, 1
    %p120 = scmp.eq.s32.totalorder %s19, 1
    %p121 = scmp.ne.s32.totalorder %s116, %s118
    %p122 = scmp.eq.s32.totalorder %s19, 0
    %p123 = por %p121, %p122
    %p124 = scmp.ne.s32.totalorder %s116, %s118
    %p125 = scmp.eq.s32.totalorder %s24, 1
    %p126 = por %p124, %p125
    %p127 = scmp.ne.s32.totalorder %s118, %s119
    %p128 = scmp.eq.s32.totalorder %s24, 0
    %p129 = por %p127, %p128
    %p130 = scmp.ne.s32.totalorder %s118, %s119
    %p131 = scmp.eq.s32.totalorder %s25, 1
    %p132 = por %p130, %p131
    %p134 = scmp.ne.s32.totalorder %s119, %s133
    %p135 = scmp.eq.s32.totalorder %s25, 0
    %p136 = por %p134, %p135
    %s138 = sadd.s32 %s137, 1
    %p141 = scmp.eq.s32.totalorder %s19, 1
    %p142 = scmp.ne.s32.totalorder %s137, %s139
    %p143 = scmp.eq.s32.totalorder %s19, 0
    %p144 = por %p142, %p143
    %p145 = scmp.ne.s32.totalorder %s137, %s139
    %p146 = scmp.eq.s32.totalorder %s24, 1
    %p147 = por %p145, %p146
    %p148 = scmp.ne.s32.totalorder %s139, %s140
    %p149 = scmp.eq.s32.totalorder %s24, 0
    %p150 = por %p148, %p149
    %p151 = scmp.ne.s32.totalorder %s139, %s140
    %p152 = scmp.eq.s32.totalorder %s25, 1
    %p153 = por %p151, %p152
    %p155 = scmp.ne.s32.totalorder %s140, %s154
    %p156 = scmp.eq.s32.totalorder %s25, 0
    %p157 = por %p155, %p156
    %s159 = sadd.s32 %s158, 1
    %p162 = scmp.eq.s32.totalorder %s19, 1
    %p163 = scmp.ne.s32.totalorder %s158, %s160
    %p164 = scmp.eq.s32.totalorder %s19, 0
    %p165 = por %p163, %p164
    %p166 = scmp.ne.s32.totalorder %s158, %s160
    %p167 = scmp.eq.s32.totalorder %s24, 1
    %p168 = por %p166, %p167
    %p169 = scmp.ne.s32.totalorder %s160, %s161
    %p170 = scmp.eq.s32.totalorder %s24, 0
    %p171 = por %p169, %p170
    %p172 = scmp.ne.s32.totalorder %s160, %s161
    %p173 = scmp.eq.s32.totalorder %s25, 1
    %p174 = por %p172, %p173
    %p176 = scmp.ne.s32.totalorder %s161, %s175
    %p177 = scmp.eq.s32.totalorder %s25, 0
    %p178 = por %p176, %p177
    %s180 = sadd.s32 %s179, 1
    %p183 = scmp.eq.s32.totalorder %s19, 1
    %p184 = scmp.ne.s32.totalorder %s179, %s181
    %p185 = scmp.eq.s32.totalorder %s19, 0
    %p186 = por %p184, %p185
    %p187 = scmp.ne.s32.totalorder %s179, %s181
    %p188 = scmp.eq.s32.totalorder %s24, 1
    %p189 = por %p187, %p188
    %p190 = scmp.ne.s32.totalorder %s181, %s182
    %p191 = scmp.eq.s32.totalorder %s24, 0
    %p192 = por %p190, %p191
    %p193 = scmp.ne.s32.totalorder %s181, %s182
    %p194 = scmp.eq.s32.totalorder %s25, 1
    %p195 = por %p193, %p194
    %p197 = scmp.ne.s32.totalorder %s182, %s196
    %p198 = scmp.eq.s32.totalorder %s25, 0
    %p199 = por %p197, %p198
    %s201 = sadd.s32 %s200, 1
    %p204 = scmp.eq.s32.totalorder %s19, 1
    %p205 = scmp.ne.s32.totalorder %s200, %s202
    %p206 = scmp.eq.s32.totalorder %s19, 0
    %p207 = por %p205, %p206
    %p208 = scmp.ne.s32.totalorder %s200, %s202
    %p209 = scmp.eq.s32.totalorder %s24, 1
    %p210 = por %p208, %p209
    %p211 = scmp.ne.s32.totalorder %s202, %s203
    %p212 = scmp.eq.s32.totalorder %s24, 0
    %p213 = por %p211, %p212
    %p214 = scmp.ne.s32.totalorder %s202, %s203
    %p215 = scmp.eq.s32.totalorder %s25, 1
    %p216 = por %p214, %p215
    %p218 = scmp.ne.s32.totalorder %s203, %s217
    %p219 = scmp.eq.s32.totalorder %s25, 0
    %p220 = por %p218, %p219
    %s222 = sadd.s32 %s221, 1
    %p225 = scmp.eq.s32.totalorder %s19, 1
    %p226 = scmp.ne.s32.totalorder %s221, %s223
    %p227 = scmp.eq.s32.totalorder %s19, 0
    %p228 = por %p226, %p227
    %p229 = scmp.ne.s32.totalorder %s221, %s223
    %p230 = scmp.eq.s32.totalorder %s24, 1
    %p231 = por %p229, %p230
    %p232 = scmp.ne.s32.totalorder %s223, %s224
    %p233 = scmp.eq.s32.totalorder %s24, 0
    %p234 = por %p232, %p233
    %p235 = scmp.ne.s32.totalorder %s223, %s224
    %p236 = scmp.eq.s32.totalorder %s25, 1
    %p237 = por %p235, %p236
    %p239 = scmp.ne.s32.totalorder %s224, %s238
    %p240 = scmp.eq.s32.totalorder %s25, 0
    %p241 = por %p239, %p240
    %s243 = sadd.s32 %s242, 1
    %p246 = scmp.eq.s32.totalorder %s19, 1
    %p247 = scmp.ne.s32.totalorder %s242, %s244
    %p248 = scmp.eq.s32.totalorder %s19, 0
    %p249 = por %p247, %p248
    %p250 = scmp.ne.s32.totalorder %s242, %s244
    %p251 = scmp.eq.s32.totalorder %s24, 1
    %p252 = por %p250, %p251
    %p253 = scmp.ne.s32.totalorder %s244, %s245
    %p254 = scmp.eq.s32.totalorder %s24, 0
    %p255 = por %p253, %p254
    %p256 = scmp.ne.s32.totalorder %s244, %s245
    %p257 = scmp.eq.s32.totalorder %s25, 1
    %p258 = por %p256, %p257
    %p260 = scmp.ne.s32.totalorder %s245, %s259
    %p261 = scmp.eq.s32.totalorder %s25, 0
    %p262 = por %p260, %p261
    %s264 = sadd.s32 %s263, 1
    %p267 = scmp.eq.s32.totalorder %s19, 1
    %p268 = scmp.ne.s32.totalorder %s263, %s265
    %p269 = scmp.eq.s32.totalorder %s19, 0
    %p270 = por %p268, %p269
    %p271 = scmp.ne.s32.totalorder %s263, %s265
    %p272 = scmp.eq.s32.totalorder %s24, 1
    %p273 = por %p271, %p272
    %p274 = scmp.ne.s32.totalorder %s265, %s266
    %p275 = scmp.eq.s32.totalorder %s24, 0
    %p276 = por %p274, %p275
    %p277 = scmp.ne.s32.totalorder %s265, %s266
    %p278 = scmp.eq.s32.totalorder %s25, 1
    %p279 = por %p277, %p278
    %p281 = scmp.ne.s32.totalorder %s266, %s280
    %p282 = scmp.eq.s32.totalorder %s25, 0
    %p283 = por %p281, %p282
    %s285 = sadd.s32 %s284, 1
    %p288 = scmp.eq.s32.totalorder %s19, 1
    %p289 = scmp.ne.s32.totalorder %s284, %s286
    %p290 = scmp.eq.s32.totalorder %s19, 0
    %p291 = por %p289, %p290
    %p292 = scmp.ne.s32.totalorder %s284, %s286
    %p293 = scmp.eq.s32.totalorder %s24, 1
    %p294 = por %p292, %p293
    %p295 = scmp.ne.s32.totalorder %s286, %s287
    %p296 = scmp.eq.s32.totalorder %s24, 0
    %p297 = por %p295, %p296
    %p298 = scmp.ne.s32.totalorder %s286, %s287
    %p299 = scmp.eq.s32.totalorder %s25, 1
    %p300 = por %p298, %p299
    %p302 = scmp.ne.s32.totalorder %s287, %s301
    %p303 = scmp.eq.s32.totalorder %s25, 0
    %p304 = por %p302, %p303
    %s305 = ssub.s32 %s19, %s26
    %p306 = scmp.eq.s32.totalorder %s305, 0
    %s308 = sadd.s32 %s307, 1
    %s309 = scalar_select %p306, %s307, %s308
    %p312 = pneg %p306
    %p313 = scmp.eq.s32.totalorder %s19, 1
    %p314 = por %p312, %p313
    %p315 = scmp.ne.s32.totalorder %s307, %s310
    %p316 = scmp.eq.s32.totalorder %s19, 0
    %p317 = por %p315, %p316
    %p318 = scmp.ne.s32.totalorder %s307, %s310
    %p319 = scmp.eq.s32.totalorder %s24, 1
    %p320 = por %p318, %p319
    %p321 = scmp.ne.s32.totalorder %s310, %s311
    %p322 = scmp.eq.s32.totalorder %s24, 0
    %p323 = por %p321, %p322
    %p324 = scmp.ne.s32.totalorder %s310, %s311
    %p325 = scmp.eq.s32.totalorder %s25, 1
    %p326 = por %p324, %p325
    %p328 = scmp.ne.s32.totalorder %s311, %s327
    %p329 = scmp.eq.s32.totalorder %s25, 0
    %p330 = por %p328, %p329
    %p331 = scmp.le.s32.totalorder 1, %s19
    %p332 = scmp.lt.s32.totalorder %s19, 3
    %p333 = pnand %p331, %p332
    %p334 = pneg %p333
    // Predicated region
    $region9: #{_lambda_.5} parent=5 // pred_check
      _
    $region10: #{_lambda_.5} parent=5 // pred_check_branch
      %336 = sbr.rel (%p333) target = $region12
    $region11: #{_lambda_.5} parent=5 // pred_region
      %s337 = ssub.s32 %s19, 1
      // Predicated region
      $region13: #{_lambda_.5} parent=11 // pred_check
        %p338 = pneg %p66
      $region14: #{_lambda_.5} parent=11 // pred_check_branch
        %340 = sbr.rel (%p338) target = $region16
      $region15: #{_lambda_.5} parent=11 // pred_region
        _
      $region16: #{_lambda_.5} parent=11 // pred_fallthru
        _
      // Predicated region
      $region17: #{_lambda_.5} parent=11 // pred_check
        %p341 = pneg %p87
      $region18: #{_lambda_.5} parent=11 // pred_check_branch
        %343 = sbr.rel (%p341) target = $region20
      $region19: #{_lambda_.5} parent=11 // pred_region
        _
      $region20: #{_lambda_.5} parent=11 // pred_fallthru
        _
      // Predicated region
      $region21: #{_lambda_.5} parent=11 // pred_check
        %p344 = pneg %p108
      $region22: #{_lambda_.5} parent=11 // pred_check_branch
        %346 = sbr.rel (%p344) target = $region24
      $region23: #{_lambda_.5} parent=11 // pred_region
        _
      $region24: #{_lambda_.5} parent=11 // pred_fallthru
        _
      // Predicated region
      $region25: #{_lambda_.5} parent=11 // pred_check
        %p347 = pneg %p129
      $region26: #{_lambda_.5} parent=11 // pred_check_branch
        %349 = sbr.rel (%p347) target = $region28
      $region27: #{_lambda_.5} parent=11 // pred_region
        _
      $region28: #{_lambda_.5} parent=11 // pred_fallthru
        _
      // Predicated region
      $region29: #{_lambda_.5} parent=11 // pred_check
        %p350 = pneg %p150
      $region30: #{_lambda_.5} parent=11 // pred_check_branch
        %352 = sbr.rel (%p350) target = $region32
      $region31: #{_lambda_.5} parent=11 // pred_region
        _
      $region32: #{_lambda_.5} parent=11 // pred_fallthru
        _
      // Predicated region
      $region33: #{_lambda_.5} parent=11 // pred_check
        %p353 = pneg %p171
      $region34: #{_lambda_.5} parent=11 // pred_check_branch
        %355 = sbr.rel (%p353) target = $region36
      $region35: #{_lambda_.5} parent=11 // pred_region
        _
      $region36: #{_lambda_.5} parent=11 // pred_fallthru
        _
      // Predicated region
      $region37: #{_lambda_.5} parent=11 // pred_check
        %p356 = pneg %p192
      $region38: #{_lambda_.5} parent=11 // pred_check_branch
        %358 = sbr.rel (%p356) target = $region40
      $region39: #{_lambda_.5} parent=11 // pred_region
        _
      $region40: #{_lambda_.5} parent=11 // pred_fallthru
        _
      // Predicated region
      $region41: #{_lambda_.5} parent=11 // pred_check
        %p359 = pneg %p213
      $region42: #{_lambda_.5} parent=11 // pred_check_branch
        %361 = sbr.rel (%p359) target = $region44
      $region43: #{_lambda_.5} parent=11 // pred_region
        _
      $region44: #{_lambda_.5} parent=11 // pred_fallthru
        _
      // Predicated region
      $region45: #{_lambda_.5} parent=11 // pred_check
        %p362 = pneg %p234
      $region46: #{_lambda_.5} parent=11 // pred_check_branch
        %364 = sbr.rel (%p362) target = $region48
      $region47: #{_lambda_.5} parent=11 // pred_region
        _
      $region48: #{_lambda_.5} parent=11 // pred_fallthru
        _
      // Predicated region
      $region49: #{_lambda_.5} parent=11 // pred_check
        %p365 = pneg %p255
      $region50: #{_lambda_.5} parent=11 // pred_check_branch
        %367 = sbr.rel (%p365) target = $region52
      $region51: #{_lambda_.5} parent=11 // pred_region
        _
      $region52: #{_lambda_.5} parent=11 // pred_fallthru
        _
      // Predicated region
      $region53: #{_lambda_.5} parent=11 // pred_check
        %p368 = pneg %p276
      $region54: #{_lambda_.5} parent=11 // pred_check_branch
        %370 = sbr.rel (%p368) target = $region56
      $region55: #{_lambda_.5} parent=11 // pred_region
        _
      $region56: #{_lambda_.5} parent=11 // pred_fallthru
        _
      // Predicated region
      $region57: #{_lambda_.5} parent=11 // pred_check
        %p371 = pneg %p297
      $region58: #{_lambda_.5} parent=11 // pred_check_branch
        %373 = sbr.rel (%p371) target = $region60
      $region59: #{_lambda_.5} parent=11 // pred_region
        _
      $region60: #{_lambda_.5} parent=11 // pred_fallthru
        _
    $region12: #{_lambda_.5} parent=5 // pred_fallthru
      _
    %p374 = scmp.lt.s32.totalorder %s19, 2
    // Predicated region
    $region61: #{_lambda_.5} parent=5 // pred_check
      %p375 = pneg %p374
    $region62: #{_lambda_.5} parent=5 // pred_check_branch
      %377 = sbr.rel (%p375) target = $region64
    $region63: #{_lambda_.5} parent=5 // pred_region
      // Predicated region
      $region65: #{_lambda_.5} parent=63 // pred_check
        %p378 = pneg %p39
      $region66: #{_lambda_.5} parent=63 // pred_check_branch
        %380 = sbr.rel (%p378) target = $region68
      $region67: #{_lambda_.5} parent=63 // pred_region
        %p381 = scmp.lt.s32.totalorder %s19, 1
        %s382 = scalar_select %p381, %s19, 1
        %s383 = smul.addr %s382, 2
        %s384 = smul.addr %s383, 4
        %s385 = scalar_lea.vmem %s0, %s384
      $region68: #{_lambda_.5} parent=63 // pred_fallthru
        _
    $region64: #{_lambda_.5} parent=5 // pred_fallthru
      _
    %p386 = scmp.le.s32.totalorder 1, %s19
    %p387 = scmp.lt.s32.totalorder %s19, 3
    %p388 = pnand %p386, %p387
    %p389 = pneg %p388
    // Predicated region
    $region69: #{_lambda_.5} parent=5 // pred_check
      _
    $region70: #{_lambda_.5} parent=5 // pred_check_branch
      %391 = sbr.rel (%p388) target = $region72
    $region71: #{_lambda_.5} parent=5 // pred_region
      %s392 = ssub.s32 %s19, 1
      %p393 = scmp.lt.s32.totalorder %s24, 1
      %s394 = scalar_select %p393, %s24, 1
      %s395 = smul.addr %s394, 2
      %s396 = smul.addr %s395, 4
      %s397 = scalar_lea.vmem %s0, %s396
      %p398 = pneg %p45
      %p399 = pneg %p42
      %p400 = pneg %p66
      %p401 = pneg %p63
      %p402 = pneg %p87
      %p403 = pneg %p84
      %p404 = pneg %p108
      %p405 = pneg %p105
      %p406 = pneg %p129
      %p407 = pneg %p126
      %p408 = pneg %p150
      %p409 = pneg %p147
      %p410 = pneg %p171
      %p411 = pneg %p168
      %p412 = pneg %p192
      %p413 = pneg %p189
      %p414 = pneg %p213
      %p415 = pneg %p210
      %p416 = pneg %p234
      %p417 = pneg %p231
      %p418 = pneg %p255
      %p419 = pneg %p252
      %p420 = pneg %p276
      %p421 = pneg %p273
      %p422 = pneg %p297
      %p423 = pneg %p294
      %p424 = pneg %p323
      %p425 = pneg %p320
      %p426 = scmp.lt.s32.totalorder %s24, 1
      %s427 = scalar_select %p426, %s24, 1
      %s428 = smul.addr %s427, 2
      %s429 = smul.addr %s428, 4
      %s430 = scalar_lea.vmem %s13, %s429
      %p431 = scmp.lt.s32.totalorder %s24, 1
      %s432 = scalar_select %p431, %s24, 1
      %s433 = smul.addr %s432, 2
      %s434 = smul.addr %s433, 4
      %s435 = scalar_lea.vmem %s0, %s434
      %p436 = scmp.lt.s32.totalorder %s24, 1
      %s437 = scalar_select %p436, %s24, 1
      %s438 = smul.addr %s437, 2
      %s439 = smul.addr %s438, 4
      %s440 = scalar_lea.vmem %s13, %s439
      %v442 = vld [vmem:[%s435] sm:$0xf]
      %v443 = vld [vmem:[%s435 + $0x4] sm:$0x3]
      %v444 = vunpack.c.l.bf16 %v442
      %v445 = vunpack.c.l.bf16 %v443
      %v446 = vld [vmem:[%s1] sm:$0x1]
      %v447 = vld [vmem:[%s2] sm:$0x1]
      %vm448 = vcmask 261120
      %v449 = vsel %vm448, %v444, 0.0
      %450 = vadd.xlane.f32.xlu0 %v449
      %v451 = vpop.xlane.xlu0 %450
      %vm452 = vcmask 256000
      %v453 = vsel %vm452, %v445, 0.0
      %454 = vadd.xlane.f32.xlu0 %v453
      %v455 = vpop.xlane.xlu0 %454
      %v456 = vrcp.pop 32.0
      %v457 = vmul.f32 %v451, %v456
      %v458 = vmul.f32 %v455, %v456
      %v459 = vsub.f32 %v444, %v457
      %v460 = vsub.f32 %v445, %v458
      %v461 = vmul.f32 %v459, %v459
      %v462 = vmul.f32 %v460, %v460
      %v463 = vsel %vm448, %v461, 0.0
      %464 = vadd.xlane.f32.xlu0 %v463
      %v465 = vpop.xlane.xlu0 %464
      %v466 = vsel %vm452, %v462, 0.0
      %467 = vadd.xlane.f32.xlu0 %v466
      %v468 = vpop.xlane.xlu0 %467
      %v469 = vmul.f32 %v465, %v456
      %v470 = vmul.f32 %v468, %v456
      %v471 = vadd.f32 %v469, 1e-12
      %v472 = vadd.f32 %v470, 1e-12
      %v473 = vrsqrt.pop %v471
      %v474 = vrsqrt.pop %v472
      %v475 = vmul.f32 %v459, %v473
      %v476 = vmul.f32 %v460, %v474
      %v478 = vlaneseq
      %v479 = vshrl.u32 %v478, 7
      %v480 = vsub.s32 0, %v479
      %v481 = vrot.slane %v446, %v480
      %v483 = vmul.f32 %v475, %v481
      %v484 = vmul.f32 %v476, %v481
      %v486 = vlaneseq
      %v487 = vshrl.u32 %v486, 7
      %v488 = vsub.s32 0, %v487
      %v489 = vrot.slane %v447, %v488
      %v491 = vadd.f32 %v483, %v489
      %v492 = vadd.f32 %v484, %v489
      %v493 = vpack.c.bf16 %v492, %v491
      %v494 = vld [vmem:[%s3] sm:$0xf]
      %v495 = vld [vmem:[%s3 + $0x4] sm:$0xf]
      %v496 = vld [vmem:[%s3 + $0x8] sm:$0xf]
      %v497 = vld [vmem:[%s3 + $0xc] sm:$0xf]
      %v498 = vld [vmem:[%s4] sm:$0x1]
      %v500 = vlaneseq
      %v501 = vshrl.u32 %v500, 7
      %v502 = vsub.s32 0, %v501
      %v503 = vrot.slane %v498, %v502
      %v509 = vunpack.c.l.b16 %v494
      %v510 = vunpack.c.l.b16 %v495
      %v511 = vunpack.c.l.b16 %v496
      %v512 = vunpack.c.l.b16 %v497
      %v513 = vpack.c.b16 %v510, %v509
      %v514 = vpack.c.b16 %v512, %v511
      %v518 = vsel %vm448, %v493, 0
      %520 = vmatprep.subr.bf16.mxu0 0
      %521 = vmatpush1.bf16.msra.mxu0 0
      %522 = vmatprep.subr.bf16.mxu0 0
      %523 = vmatpush1.bf16.msra.mxu0 0
      %524 = vmatprep.subr.bf16.mxu0 0
      %525 = vmatpush1.bf16.msra.mxu0 0
      %526 = vmatprep.subr.bf16.mxu0 0
      %527 = vmatpush1.bf16.msra.mxu0 0
      %528 = vmatprep.subr.bf16.mxu0 0
      %529 = vmatpush1.bf16.msra.mxu0 0
      %530 = vmatprep.subr.bf16.mxu0 0
      %531 = vmatpush1.bf16.msra.mxu0 0
      %532 = vmatprep.subr.bf16.mxu0 0
      %533 = vmatpush1.bf16.msra.mxu0 %v514
      %534 = vmatprep.subr.bf16.mxu0 0
      %535 = vmatpush1.bf16.msra.mxu0 %v513
      %536 = vmatprep.subr.bf16.mxu0 0
      %537 = vmatpush2.bf16.msra.mxu0 0
      %538 = vmatprep.subr.bf16.mxu0 0
      %539 = vmatpush2.bf16.msra.mxu0 0
      %540 = vmatprep.subr.bf16.mxu0 0
      %541 = vmatpush2.bf16.msra.mxu0 0
      %542 = vmatprep.subr.bf16.mxu0 0
      %543 = vmatpush2.bf16.msra.mxu0 0
      %544 = vmatprep.subr.bf16.mxu0 0
      %545 = vmatpush2.bf16.msra.mxu0 0
      %546 = vmatprep.subr.bf16.mxu0 0
      %547 = vmatpush2.bf16.msra.mxu0 0
      %548 = vmatprep.subr.bf16.mxu0 0
      %549 = vmatpush2.bf16.msra.mxu0 0
      %550 = vmatprep.subr.bf16.mxu0 0
      %551 = vmatpush2.bf16.msra.mxu0 0
      %552 = vmatprep.mubr.bf16.mxu0 0
      %553 = vmatmul.mubr.bf16.gmra.mxu0 %v518
      %v554 = vpop.f32.mrf.mxu0
      %v555 = vadd.f32 %v503, %v554
      %v556 = vpop.f32.mrf.mxu0
      %v557 = vpop.f32.mrf.mxu0
      %v558 = vadd.f32 %v503, %v557
      %v559 = vpop.f32.mrf.mxu0
      %560 = vdwg.mxu0
      %v561 = vmul.f32 %v555, 0.35355338
      %v562 = vmul.f32 %v558, 0.35355338
      %v563 = vpack.c.bf16 %v562, %v561
      %v564 = vpack.c.bf16 %v558, %v555
      %566 = vrot.lane.b32.xlu0 %v564, 96
      %v567 = vpop.permute.xlu0 %566
      %vm568 = vcmask 64512
      %v570 = vsel %vm568, %v563, 0
      %v573 = vsel %vm568, %v567, 0
      %575 = vmatprep.subr.bf16.mxu0 0
      %576 = vmatpush1.bf16.xpose.msra.mxu0 0
      %577 = vmatprep.subr.bf16.mxu0 0
      %578 = vmatpush1.bf16.xpose.msra.mxu0 0
      %579 = vmatprep.subr.bf16.mxu0 0
      %580 = vmatpush1.bf16.xpose.msra.mxu0 0
      %581 = vmatprep.subr.bf16.mxu0 0
      %582 = vmatpush1.bf16.xpose.msra.mxu0 0
      %583 = vmatprep.subr.bf16.mxu0 0
      %584 = vmatpush1.bf16.xpose.msra.mxu0 0
      %585 = vmatprep.subr.bf16.mxu0 0
      %586 = vmatpush1.bf16.xpose.msra.mxu0 0
      %587 = vmatprep.subr.bf16.mxu0 0
      %588 = vmatpush1.bf16.xpose.msra.mxu0 0
      %589 = vmatprep.subr.bf16.mxu0 0
      %590 = vmatpush1.bf16.xpose.msra.mxu0 %v573
      %591 = vmatprep.subr.bf16.mxu0 0
      %592 = vmatpush2.bf16.xpose.msra.mxu0 0
      %593 = vmatprep.subr.bf16.mxu0 0
      %594 = vmatpush2.bf16.xpose.msra.mxu0 0
      %595 = vmatprep.subr.bf16.mxu0 0
      %596 = vmatpush2.bf16.xpose.msra.mxu0 0
      %597 = vmatprep.subr.bf16.mxu0 0
      %598 = vmatpush2.bf16.xpose.msra.mxu0 0
      %599 = vmatprep.subr.bf16.mxu0 0
      %600 = vmatpush2.bf16.xpose.msra.mxu0 0
      %601 = vmatprep.subr.bf16.mxu0 0
      %602 = vmatpush2.bf16.xpose.msra.mxu0 0
      %603 = vmatprep.subr.bf16.mxu0 0
      %604 = vmatpush2.bf16.xpose.msra.mxu0 0
      %605 = vmatprep.subr.bf16.mxu0 0
      %606 = vmatpush2.bf16.xpose.msra.mxu0 0
      %607 = vmatprep.mubr.bf16.mxu0 0
      %608 = vmatmul.mubr.bf16.gmra.mxu0 %v570
      %v609 = vpop.f32.mrf.mxu0
      %v610 = vadd.f32 0.0, %v609
      %v611 = vpop.f32.mrf.mxu0
      %v612 = vpop.f32.mrf.mxu0
      %v613 = vadd.f32 0.0, %v612
      %v614 = vpop.f32.mrf.mxu0
      %615 = vdwg.mxu0
      %vm616 = vcmask 89088
      %v617 = vsel %vm616, %v610, -inf
      %618 = vmax.xlane.f32.xlu0 %v617
      %v619 = vpop.xlane.xlu0 %618
      %vm620 = vcmask 83968
      %v621 = vsel %vm620, %v613, -inf
      %622 = vmax.xlane.f32.xlu0 %v621
      %v623 = vpop.xlane.xlu0 %622
      %v624 = vsub.f32 %v610, %v619
      %v625 = vsub.f32 %v613, %v623
      %v626 = vmul.f32 %v624, 1.442695
      %v627 = vpow.pop %v626
      %v628 = vmul.f32 %v625, 1.442695
      %v629 = vpow.pop %v628
      %v630 = vsel %vm616, %v627, 0.0
      %631 = vadd.xlane.f32.xlu0 %v630
      %v632 = vpop.xlane.xlu0 %631
      %v633 = vsel %vm620, %v629, 0.0
      %634 = vadd.xlane.f32.xlu0 %v633
      %v635 = vpop.xlane.xlu0 %634
      %v636 = vrcp.pop %v632
      %v637 = vrcp.pop %v635
      %v638 = vmul.f32 %v627, %v636
      %v639 = vmul.f32 %v629, %v637
      %v640 = vpack.c.bf16 %v639, %v638
      %641 = vrot.lane.b32.xlu0 %v564, 64
      %v642 = vpop.permute.xlu0 %641
      %v644 = vsel %vm616, %v640, 0
      %vm646 = vcmask 1044480
      %vm647 = vcmask 1045504
      %v648 = vsel %vm646, 4294967295, 65535
      %v649 = vsel %vm647, %v648, 0
      %v651 = vand.u32 %v642, %v649
      %653 = vmatprep.subr.bf16.mxu0 0
      %654 = vmatpush1.bf16.msra.mxu0 0
      %655 = vmatprep.subr.bf16.mxu0 0
      %656 = vmatpush1.bf16.msra.mxu0 0
      %657 = vmatprep.subr.bf16.mxu0 0
      %658 = vmatpush1.bf16.msra.mxu0 0
      %659 = vmatprep.subr.bf16.mxu0 0
      %660 = vmatpush1.bf16.msra.mxu0 0
      %661 = vmatprep.subr.bf16.mxu0 0
      %662 = vmatpush1.bf16.msra.mxu0 0
      %663 = vmatprep.subr.bf16.mxu0 0
      %664 = vmatpush1.bf16.msra.mxu0 0
      %665 = vmatprep.subr.bf16.mxu0 0
      %666 = vmatpush1.bf16.msra.mxu0 0
      %667 = vmatprep.subr.bf16.mxu0 0
      %668 = vmatpush1.bf16.msra.mxu0 %v651
      %669 = vmatprep.subr.bf16.mxu0 0
      %670 = vmatpush2.bf16.msra.mxu0 0
      %671 = vmatprep.subr.bf16.mxu0 0
      %672 = vmatpush2.bf16.msra.mxu0 0
      %673 = vmatprep.subr.bf16.mxu0 0
      %674 = vmatpush2.bf16.msra.mxu0 0
      %675 = vmatprep.subr.bf16.mxu0 0
      %676 = vmatpush2.bf16.msra.mxu0 0
      %677 = vmatprep.subr.bf16.mxu0 0
      %678 = vmatpush2.bf16.msra.mxu0 0
      %679 = vmatprep.subr.bf16.mxu0 0
      %680 = vmatpush2.bf16.msra.mxu0 0
      %681 = vmatprep.subr.bf16.mxu0 0
      %682 = vmatpush2.bf16.msra.mxu0 0
      %683 = vmatprep.subr.bf16.mxu0 0
      %684 = vmatpush2.bf16.msra.mxu0 0
      %685 = vmatprep.mubr.bf16.mxu0 0
      %686 = vmatmul.mubr.bf16.gmra.mxu0 %v644
      %v687 = vpop.f32.mrf.mxu0
      %v688 = vadd.f32 0.0, %v687
      %v689 = vpop.f32.mrf.mxu0
      %v690 = vpop.f32.mrf.mxu0
      %v691 = vadd.f32 0.0, %v690
      %v692 = vpop.f32.mrf.mxu0
      %693 = vdwg.mxu0
      %694 = vst.msk [vmem:[#allocation2] sm:$0xff] %vm568, %v688
      %vm695 = vcmask 59392
      %696 = vst.msk [vmem:[#allocation2 + $0x8] sm:$0x7] %vm695, %v691
      %698 = vrot.lane.b32.xlu0 %v563, 120
      %v699 = vpop.permute.xlu0 %698
      %700 = vrot.lane.b32.xlu0 %v564, 88
      %v701 = vpop.permute.xlu0 %700
      %v703 = vsel %vm568, %v699, 0
      %v706 = vsel %vm568, %v701, 0
      %708 = vmatprep.subr.bf16.mxu0 0
      %709 = vmatpush1.bf16.xpose.msra.mxu0 0
      %710 = vmatprep.subr.bf16.mxu0 0
      %711 = vmatpush1.bf16.xpose.msra.mxu0 0
      %712 = vmatprep.subr.bf16.mxu0 0
      %713 = vmatpush1.bf16.xpose.msra.mxu0 0
      %714 = vmatprep.subr.bf16.mxu0 0
      %715 = vmatpush1.bf16.xpose.msra.mxu0 0
      %716 = vmatprep.subr.bf16.mxu0 0
      %717 = vmatpush1.bf16.xpose.msra.mxu0 0
      %718 = vmatprep.subr.bf16.mxu0 0
      %719 = vmatpush1.bf16.xpose.msra.mxu0 0
      %720 = vmatprep.subr.bf16.mxu0 0
      %721 = vmatpush1.bf16.xpose.msra.mxu0 0
      %722 = vmatprep.subr.bf16.mxu0 0
      %723 = vmatpush1.bf16.xpose.msra.mxu0 %v706
      %724 = vmatprep.subr.bf16.mxu0 0
      %725 = vmatpush2.bf16.xpose.msra.mxu0 0
      %726 = vmatprep.subr.bf16.mxu0 0
      %727 = vmatpush2.bf16.xpose.msra.mxu0 0
      %728 = vmatprep.subr.bf16.mxu0 0
      %729 = vmatpush2.bf16.xpose.msra.mxu0 0
      %730 = vmatprep.subr.bf16.mxu0 0
      %731 = vmatpush2.bf16.xpose.msra.mxu0 0
      %732 = vmatprep.subr.bf16.mxu0 0
      %733 = vmatpush2.bf16.xpose.msra.mxu0 0
      %734 = vmatprep.subr.bf16.mxu0 0
      %735 = vmatpush2.bf16.xpose.msra.mxu0 0
      %736 = vmatprep.subr.bf16.mxu0 0
      %737 = vmatpush2.bf16.xpose.msra.mxu0 0
      %738 = vmatprep.subr.bf16.mxu0 0
      %739 = vmatpush2.bf16.xpose.msra.mxu0 0
      %740 = vmatprep.mubr.bf16.mxu0 0
      %741 = vmatmul.mubr.bf16.gmra.mxu0 %v703
      %v742 = vpop.f32.mrf.mxu0
      %v743 = vadd.f32 0.0, %v742
      %v744 = vpop.f32.mrf.mxu0
      %v745 = vpop.f32.mrf.mxu0
      %v746 = vadd.f32 0.0, %v745
      %v747 = vpop.f32.mrf.mxu0
      %748 = vdwg.mxu0
      %v749 = vsel %vm616, %v743, -inf
      %750 = vmax.xlane.f32.xlu0 %v749
      %v751 = vpop.xlane.xlu0 %750
      %v752 = vsel %vm620, %v746, -inf
      %753 = vmax.xlane.f32.xlu0 %v752
      %v754 = vpop.xlane.xlu0 %753
      %v755 = vsub.f32 %v743, %v751
      %v756 = vsub.f32 %v746, %v754
      %v757 = vmul.f32 %v755, 1.442695
      %v758 = vpow.pop %v757
      %v759 = vmul.f32 %v756, 1.442695
      %v760 = vpow.pop %v759
      %v761 = vsel %vm616, %v758, 0.0
      %762 = vadd.xlane.f32.xlu0 %v761
      %v763 = vpop.xlane.xlu0 %762
      %v764 = vsel %vm620, %v760, 0.0
      %765 = vadd.xlane.f32.xlu0 %v764
      %v766 = vpop.xlane.xlu0 %765
      %v767 = vrcp.pop %v763
      %v768 = vrcp.pop %v766
      %v769 = vmul.f32 %v758, %v767
      %v770 = vmul.f32 %v760, %v768
      %v771 = vpack.c.bf16 %v770, %v769
      %772 = vrot.lane.b32.xlu0 %v564, 56
      %v773 = vpop.permute.xlu0 %772
      %v775 = vsel %vm616, %v771, 0
      %v778 = vand.u32 %v773, %v649
      %780 = vmatprep.subr.bf16.mxu0 0
      %781 = vmatpush1.bf16.msra.mxu0 0
      %782 = vmatprep.subr.bf16.mxu0 0
      %783 = vmatpush1.bf16.msra.mxu0 0
      %784 = vmatprep.subr.bf16.mxu0 0
      %785 = vmatpush1.bf16.msra.mxu0 0
      %786 = vmatprep.subr.bf16.mxu0 0
      %787 = vmatpush1.bf16.msra.mxu0 0
      %788 = vmatprep.subr.bf16.mxu0 0
      %789 = vmatpush1.bf16.msra.mxu0 0
      %790 = vmatprep.subr.bf16.mxu0 0
      %791 = vmatpush1.bf16.msra.mxu0 0
      %792 = vmatprep.subr.bf16.mxu0 0
      %793 = vmatpush1.bf16.msra.mxu0 0
      %794 = vmatprep.subr.bf16.mxu0 0
      %795 = vmatpush1.bf16.msra.mxu0 %v778
      %796 = vmatprep.subr.bf16.mxu0 0
      %797 = vmatpush2.bf16.msra.mxu0 0
      %798 = vmatprep.subr.bf16.mxu0 0
      %799 = vmatpush2.bf16.msra.mxu0 0
      %800 = vmatprep.subr.bf16.mxu0 0
      %801 = vmatpush2.bf16.msra.mxu0 0
      %802 = vmatprep.subr.bf16.mxu0 0
      %803 = vmatpush2.bf16.msra.mxu0 0
      %804 = vmatprep.subr.bf16.mxu0 0
      %805 = vmatpush2.bf16.msra.mxu0 0
      %806 = vmatprep.subr.bf16.mxu0 0
      %807 = vmatpush2.bf16.msra.mxu0 0
      %808 = vmatprep.subr.bf16.mxu0 0
      %809 = vmatpush2.bf16.msra.mxu0 0
      %810 = vmatprep.subr.bf16.mxu0 0
      %811 = vmatpush2.bf16.msra.mxu0 0
      %812 = vmatprep.mubr.bf16.mxu0 0
      %813 = vmatmul.mubr.bf16.gmra.mxu0 %v775
      %v814 = vpop.f32.mrf.mxu0
      %v815 = vadd.f32 0.0, %v814
      %v816 = vpop.f32.mrf.mxu0
      %v817 = vpop.f32.mrf.mxu0
      %v818 = vadd.f32 0.0, %v817
      %v819 = vpop.f32.mrf.mxu0
      %820 = vdwg.mxu0
      %823 = vrot.lane.b32.xlu0 %v815, 8
      %v824 = vpop.permute.xlu0 %823
      %825 = vrot.lane.b32.xlu0 %v818, 8
      %v826 = vpop.permute.xlu0 %825
      %vm829 = vcmask 130112
      %830 = vst.msk [vmem:[#allocation2] sm:$0xff] %vm829, %v824
      %vm831 = vcmask 124992
      %832 = vst.msk [vmem:[#allocation2 + $0x8] sm:$0x7] %vm831, %v826
      %833 = vrot.lane.b32.xlu0 %v563, 112
      %v834 = vpop.permute.xlu0 %833
      %835 = vrot.lane.b32.xlu0 %v564, 80
      %v836 = vpop.permute.xlu0 %835
      %v838 = vsel %vm568, %v834, 0
      %v841 = vsel %vm568, %v836, 0
      %843 = vmatprep.subr.bf16.mxu0 0
      %844 = vmatpush1.bf16.xpose.msra.mxu0 0
      %845 = vmatprep.subr.bf16.mxu0 0
      %846 = vmatpush1.bf16.xpose.msra.mxu0 0
      %847 = vmatprep.subr.bf16.mxu0 0
      %848 = vmatpush1.bf16.xpose.msra.mxu0 0
      %849 = vmatprep.subr.bf16.mxu0 0
      %850 = vmatpush1.bf16.xpose.msra.mxu0 0
      %851 = vmatprep.subr.bf16.mxu0 0
      %852 = vmatpush1.bf16.xpose.msra.mxu0 0
      %853 = vmatprep.subr.bf16.mxu0 0
      %854 = vmatpush1.bf16.xpose.msra.mxu0 0
      %855 = vmatprep.subr.bf16.mxu0 0
      %856 = vmatpush1.bf16.xpose.msra.mxu0 0
      %857 = vmatprep.subr.bf16.mxu0 0
      %858 = vmatpush1.bf16.xpose.msra.mxu0 %v841
      %859 = vmatprep.subr.bf16.mxu0 0
      %860 = vmatpush2.bf16.xpose.msra.mxu0 0
      %861 = vmatprep.subr.bf16.mxu0 0
      %862 = vmatpush2.bf16.xpose.msra.mxu0 0
      %863 = vmatprep.subr.bf16.mxu0 0
      %864 = vmatpush2.bf16.xpose.msra.mxu0 0
      %865 = vmatprep.subr.bf16.mxu0 0
      %866 = vmatpush2.bf16.xpose.msra.mxu0 0
      %867 = vmatprep.subr.bf16.mxu0 0
      %868 = vmatpush2.bf16.xpose.msra.mxu0 0
      %869 = vmatprep.subr.bf16.mxu0 0
      %870 = vmatpush2.bf16.xpose.msra.mxu0 0
      %871 = vmatprep.subr.bf16.mxu0 0
      %872 = vmatpush2.bf16.xpose.msra.mxu0 0
      %873 = vmatprep.subr.bf16.mxu0 0
      %874 = vmatpush2.bf16.xpose.msra.mxu0 0
      %875 = vmatprep.mubr.bf16.mxu0 0
      %876 = vmatmul.mubr.bf16.gmra.mxu0 %v838
      %v877 = vpop.f32.mrf.mxu0
      %v878 = vadd.f32 0.0, %v877
      %v879 = vpop.f32.mrf.mxu0
      %v880 = vpop.f32.mrf.mxu0
      %v881 = vadd.f32 0.0, %v880
      %v882 = vpop.f32.mrf.mxu0
      %883 = vdwg.mxu0
      %v884 = vsel %vm616, %v878, -inf
      %885 = vmax.xlane.f32.xlu0 %v884
      %v886 = vpop.xlane.xlu0 %885
      %v887 = vsel %vm620, %v881, -inf
      %888 = vmax.xlane.f32.xlu0 %v887
      %v889 = vpop.xlane.xlu0 %888
      %v890 = vsub.f32 %v878, %v886
      %v891 = vsub.f32 %v881, %v889
      %v892 = vmul.f32 %v890, 1.442695
      %v893 = vpow.pop %v892
      %v894 = vmul.f32 %v891, 1.442695
      %v895 = vpow.pop %v894
      %v896 = vsel %vm616, %v893, 0.0
      %897 = vadd.xlane.f32.xlu0 %v896
      %v898 = vpop.xlane.xlu0 %897
      %v899 = vsel %vm620, %v895, 0.0
      %900 = vadd.xlane.f32.xlu0 %v899
      %v901 = vpop.xlane.xlu0 %900
      %v902 = vrcp.pop %v898
      %v903 = vrcp.pop %v901
      %v904 = vmul.f32 %v893, %v902
      %v905 = vmul.f32 %v895, %v903
      %v906 = vpack.c.bf16 %v905, %v904
      %907 = vrot.lane.b32.xlu0 %v564, 48
      %v908 = vpop.permute.xlu0 %907
      %v910 = vsel %vm616, %v906, 0
      %v913 = vand.u32 %v908, %v649
      %915 = vmatprep.subr.bf16.mxu0 0
      %916 = vmatpush1.bf16.msra.mxu0 0
      %917 = vmatprep.subr.bf16.mxu0 0
      %918 = vmatpush1.bf16.msra.mxu0 0
      %919 = vmatprep.subr.bf16.mxu0 0
      %920 = vmatpush1.bf16.msra.mxu0 0
      %921 = vmatprep.subr.bf16.mxu0 0
      %922 = vmatpush1.bf16.msra.mxu0 0
      %923 = vmatprep.subr.bf16.mxu0 0
      %924 = vmatpush1.bf16.msra.mxu0 0
      %925 = vmatprep.subr.bf16.mxu0 0
      %926 = vmatpush1.bf16.msra.mxu0 0
      %927 = vmatprep.subr.bf16.mxu0 0
      %928 = vmatpush1.bf16.msra.mxu0 0
      %929 = vmatprep.subr.bf16.mxu0 0
      %930 = vmatpush1.bf16.msra.mxu0 %v913
      %931 = vmatprep.subr.bf16.mxu0 0
      %932 = vmatpush2.bf16.msra.mxu0 0
      %933 = vmatprep.subr.bf16.mxu0 0
      %934 = vmatpush2.bf16.msra.mxu0 0
      %935 = vmatprep.subr.bf16.mxu0 0
      %936 = vmatpush2.bf16.msra.mxu0 0
      %937 = vmatprep.subr.bf16.mxu0 0
      %938 = vmatpush2.bf16.msra.mxu0 0
      %939 = vmatprep.subr.bf16.mxu0 0
      %940 = vmatpush2.bf16.msra.mxu0 0
      %941 = vmatprep.subr.bf16.mxu0 0
      %942 = vmatpush2.bf16.msra.mxu0 0
      %943 = vmatprep.subr.bf16.mxu0 0
      %944 = vmatpush2.bf16.msra.mxu0 0
      %945 = vmatprep.subr.bf16.mxu0 0
      %946 = vmatpush2.bf16.msra.mxu0 0
      %947 = vmatprep.mubr.bf16.mxu0 0
      %948 = vmatmul.mubr.bf16.gmra.mxu0 %v910
      %v949 = vpop.f32.mrf.mxu0
      %v950 = vadd.f32 0.0, %v949
      %v951 = vpop.f32.mrf.mxu0
      %v952 = vpop.f32.mrf.mxu0
      %v953 = vadd.f32 0.0, %v952
      %v954 = vpop.f32.mrf.mxu0
      %955 = vdwg.mxu0
      %958 = vrot.lane.b32.xlu0 %v950, 16
      %v959 = vpop.permute.xlu0 %958
      %960 = vrot.lane.b32.xlu0 %v953, 16
      %v961 = vpop.permute.xlu0 %960
      %vm964 = vcmask 195712
      %965 = vst.msk [vmem:[#allocation2] sm:$0xff] %vm964, %v959
      %vm966 = vcmask 190592
      %967 = vst.msk [vmem:[#allocation2 + $0x8] sm:$0x7] %vm966, %v961
      %968 = vrot.lane.b32.xlu0 %v563, 104
      %v969 = vpop.permute.xlu0 %968
      %970 = vrot.lane.b32.xlu0 %v564, 72
      %v971 = vpop.permute.xlu0 %970
      %v973 = vsel %vm568, %v969, 0
      %v976 = vsel %vm568, %v971, 0
      %978 = vmatprep.subr.bf16.mxu0 0
      %979 = vmatpush1.bf16.xpose.msra.mxu0 0
      %980 = vmatprep.subr.bf16.mxu0 0
      %981 = vmatpush1.bf16.xpose.msra.mxu0 0
      %982 = vmatprep.subr.bf16.mxu0 0
      %983 = vmatpush1.bf16.xpose.msra.mxu0 0
      %984 = vmatprep.subr.bf16.mxu0 0
      %985 = vmatpush1.bf16.xpose.msra.mxu0 0
      %986 = vmatprep.subr.bf16.mxu0 0
      %987 = vmatpush1.bf16.xpose.msra.mxu0 0
      %988 = vmatprep.subr.bf16.mxu0 0
      %989 = vmatpush1.bf16.xpose.msra.mxu0 0
      %990 = vmatprep.subr.bf16.mxu0 0
      %991 = vmatpush1.bf16.xpose.msra.mxu0 0
      %992 = vmatprep.subr.bf16.mxu0 0
      %993 = vmatpush1.bf16.xpose.msra.mxu0 %v976
      %994 = vmatprep.subr.bf16.mxu0 0
      %995 = vmatpush2.bf16.xpose.msra.mxu0 0
      %996 = vmatprep.subr.bf16.mxu0 0
      %997 = vmatpush2.bf16.xpose.msra.mxu0 0
      %998 = vmatprep.subr.bf16.mxu0 0
      %999 = vmatpush2.bf16.xpose.msra.mxu0 0
      %1000 = vmatprep.subr.bf16.mxu0 0
      %1001 = vmatpush2.bf16.xpose.msra.mxu0 0
      %1002 = vmatprep.subr.bf16.mxu0 0
      %1003 = vmatpush2.bf16.xpose.msra.mxu0 0
      %1004 = vmatprep.subr.bf16.mxu0 0
      %1005 = vmatpush2.bf16.xpose.msra.mxu0 0
      %1006 = vmatprep.subr.bf16.mxu0 0
      %1007 = vmatpush2.bf16.xpose.msra.mxu0 0
      %1008 = vmatprep.subr.bf16.mxu0 0
      %1009 = vmatpush2.bf16.xpose.msra.mxu0 0
      %1010 = vmatprep.mubr.bf16.mxu0 0
      %1011 = vmatmul.mubr.bf16.gmra.mxu0 %v973
      %v1012 = vpop.f32.mrf.mxu0
      %v1013 = vadd.f32 0.0, %v1012
      %v1014 = vpop.f32.mrf.mxu0
      %v1015 = vpop.f32.mrf.mxu0
      %v1016 = vadd.f32 0.0, %v1015
      %v1017 = vpop.f32.mrf.mxu0
      %1018 = vdwg.mxu0
      %v1019 = vsel %vm616, %v1013, -inf
      %1020 = vmax.xlane.f32.xlu0 %v1019
      %v1021 = vpop.xlane.xlu0 %1020
      %v1022 = vsel %vm620, %v1016, -inf
      %1023 = vmax.xlane.f32.xlu0 %v1022
      %v1024 = vpop.xlane.xlu0 %1023
      %v1025 = vsub.f32 %v1013, %v1021
      %v1026 = vsub.f32 %v1016, %v1024
      %v1027 = vmul.f32 %v1025, 1.442695
      %v1028 = vpow.pop %v1027
      %v1029 = vmul.f32 %v1026, 1.442695
      %v1030 = vpow.pop %v1029
      %v1031 = vsel %vm616, %v1028, 0.0
      %1032 = vadd.xlane.f32.xlu0 %v1031
      %v1033 = vpop.xlane.xlu0 %1032
      %v1034 = vsel %vm620, %v1030, 0.0
      %1035 = vadd.xlane.f32.xlu0 %v1034
      %v1036 = vpop.xlane.xlu0 %1035
      %v1037 = vrcp.pop %v1033
      %v1038 = vrcp.pop %v1036
      %v1039 = vmul.f32 %v1028, %v1037
      %v1040 = vmul.f32 %v1030, %v1038
      %v1041 = vpack.c.bf16 %v1040, %v1039
      %1042 = vrot.lane.b32.xlu0 %v564, 40
      %v1043 = vpop.permute.xlu0 %1042
      %v1045 = vsel %vm616, %v1041, 0
      %v1048 = vand.u32 %v1043, %v649
      %1050 = vmatprep.subr.bf16.mxu0 0
      %1051 = vmatpush1.bf16.msra.mxu0 0
      %1052 = vmatprep.subr.bf16.mxu0 0
      %1053 = vmatpush1.bf16.msra.mxu0 0
      %1054 = vmatprep.subr.bf16.mxu0 0
      %1055 = vmatpush1.bf16.msra.mxu0 0
      %1056 = vmatprep.subr.bf16.mxu0 0
      %1057 = vmatpush1.bf16.msra.mxu0 0
      %1058 = vmatprep.subr.bf16.mxu0 0
      %1059 = vmatpush1.bf16.msra.mxu0 0
      %1060 = vmatprep.subr.bf16.mxu0 0
      %1061 = vmatpush1.bf16.msra.mxu0 0
      %1062 = vmatprep.subr.bf16.mxu0 0
      %1063 = vmatpush1.bf16.msra.mxu0 0
      %1064 = vmatprep.subr.bf16.mxu0 0
      %1065 = vmatpush1.bf16.msra.mxu0 %v1048
      %1066 = vmatprep.subr.bf16.mxu0 0
      %1067 = vmatpush2.bf16.msra.mxu0 0
      %1068 = vmatprep.subr.bf16.mxu0 0
      %1069 = vmatpush2.bf16.msra.mxu0 0
      %1070 = vmatprep.subr.bf16.mxu0 0
      %1071 = vmatpush2.bf16.msra.mxu0 0
      %1072 = vmatprep.subr.bf16.mxu0 0
      %1073 = vmatpush2.bf16.msra.mxu0 0
      %1074 = vmatprep.subr.bf16.mxu0 0
      %1075 = vmatpush2.bf16.msra.mxu0 0
      %1076 = vmatprep.subr.bf16.mxu0 0
      %1077 = vmatpush2.bf16.msra.mxu0 0
      %1078 = vmatprep.subr.bf16.mxu0 0
      %1079 = vmatpush2.bf16.msra.mxu0 0
      %1080 = vmatprep.subr.bf16.mxu0 0
      %1081 = vmatpush2.bf16.msra.mxu0 0
      %1082 = vmatprep.mubr.bf16.mxu0 0
      %1083 = vmatmul.mubr.bf16.gmra.mxu0 %v1045
      %v1084 = vpop.f32.mrf.mxu0
      %v1085 = vadd.f32 0.0, %v1084
      %v1086 = vpop.f32.mrf.mxu0
      %v1087 = vpop.f32.mrf.mxu0
      %v1088 = vadd.f32 0.0, %v1087
      %v1089 = vpop.f32.mrf.mxu0
      %1090 = vdwg.mxu0
      %1093 = vrot.lane.b32.xlu0 %v1085, 24
      %v1094 = vpop.permute.xlu0 %1093
      %1095 = vrot.lane.b32.xlu0 %v1088, 24
      %v1096 = vpop.permute.xlu0 %1095
      %vm1099 = vcmask 261312
      %1100 = vst.msk [vmem:[#allocation2] sm:$0xff] %vm1099, %v1094
      %vm1101 = vcmask 256192
      %1102 = vst.msk [vmem:[#allocation2 + $0x8] sm:$0x7] %vm1101, %v1096
      %v1103 = vld [vmem:[#allocation2] sm:$0xff]
      %v1104 = vld [vmem:[#allocation2 + $0x8] sm:$0x7]
      %v1105 = vpack.c.bf16 %v1104, %v1103
      %v1106 = vld [vmem:[%s5] sm:$0xf]
      %v1107 = vld [vmem:[%s5 + $0x4] sm:$0xf]
      %v1108 = vld [vmem:[%s5 + $0x8] sm:$0xf]
      %v1109 = vld [vmem:[%s5 + $0xc] sm:$0xf]
      %v1110 = vld [vmem:[%s6] sm:$0x1]
      %v1112 = vlaneseq
      %v1113 = vshrl.u32 %v1112, 7
      %v1114 = vsub.s32 0, %v1113
      %v1115 = vrot.slane %v1110, %v1114
      %v1121 = vunpack.c.l.b16 %v1106
      %v1122 = vunpack.c.l.b16 %v1107
      %v1123 = vunpack.c.l.b16 %v1108
      %v1124 = vunpack.c.l.b16 %v1109
      %v1125 = vpack.c.b16 %v1122, %v1121
      %v1126 = vpack.c.b16 %v1124, %v1123
      %v1130 = vsel %vm448, %v1105, 0
      %1132 = vmatprep.subr.bf16.mxu0 0
      %1133 = vmatpush1.bf16.msra.mxu0 0
      %1134 = vmatprep.subr.bf16.mxu0 0
      %1135 = vmatpush1.bf16.msra.mxu0 0
      %1136 = vmatprep.subr.bf16.mxu0 0
      %1137 = vmatpush1.bf16.msra.mxu0 0
      %1138 = vmatprep.subr.bf16.mxu0 0
      %1139 = vmatpush1.bf16.msra.mxu0 0
      %1140 = vmatprep.subr.bf16.mxu0 0
      %1141 = vmatpush1.bf16.msra.mxu0 0
      %1142 = vmatprep.subr.bf16.mxu0 0
      %1143 = vmatpush1.bf16.msra.mxu0 0
      %1144 = vmatprep.subr.bf16.mxu0 0
      %1145 = vmatpush1.bf16.msra.mxu0 %v1126
      %1146 = vmatprep.subr.bf16.mxu0 0
      %1147 = vmatpush1.bf16.msra.mxu0 %v1125
      %1148 = vmatprep.subr.bf16.mxu0 0
      %1149 = vmatpush2.bf16.msra.mxu0 0
      %1150 = vmatprep.subr.bf16.mxu0 0
      %1151 = vmatpush2.bf16.msra.mxu0 0
      %1152 = vmatprep.subr.bf16.mxu0 0
      %1153 = vmatpush2.bf16.msra.mxu0 0
      %1154 = vmatprep.subr.bf16.mxu0 0
      %1155 = vmatpush2.bf16.msra.mxu0 0
      %1156 = vmatprep.subr.bf16.mxu0 0
      %1157 = vmatpush2.bf16.msra.mxu0 0
      %1158 = vmatprep.subr.bf16.mxu0 0
      %1159 = vmatpush2.bf16.msra.mxu0 0
      %1160 = vmatprep.subr.bf16.mxu0 0
      %1161 = vmatpush2.bf16.msra.mxu0 0
      %1162 = vmatprep.subr.bf16.mxu0 0
      %1163 = vmatpush2.bf16.msra.mxu0 0
      %1164 = vmatprep.mubr.bf16.mxu0 0
      %1165 = vmatmul.mubr.bf16.gmra.mxu0 %v1130
      %v1166 = vpop.f32.mrf.mxu0
      %v1167 = vadd.f32 %v1115, %v1166
      %v1168 = vpop.f32.mrf.mxu0
      %v1169 = vpop.f32.mrf.mxu0
      %v1170 = vadd.f32 %v1115, %v1169
      %v1171 = vpop.f32.mrf.mxu0
      %1172 = vdwg.mxu0
      %v1173 = vadd.f32 %v444, %v1167
      %v1174 = vadd.f32 %v445, %v1170
      %v1175 = vld [vmem:[%s7] sm:$0x1]
      %v1176 = vld [vmem:[%s8] sm:$0x1]
      %v1177 = vsel %vm448, %v1173, 0.0
      %1178 = vadd.xlane.f32.xlu0 %v1177
      %v1179 = vpop.xlane.xlu0 %1178
      %v1180 = vsel %vm452, %v1174, 0.0
      %1181 = vadd.xlane.f32.xlu0 %v1180
      %v1182 = vpop.xlane.xlu0 %1181
      %v1183 = vmul.f32 %v1179, %v456
      %v1184 = vmul.f32 %v1182, %v456
      %v1185 = vsub.f32 %v1173, %v1183
      %v1186 = vsub.f32 %v1174, %v1184
      %v1187 = vmul.f32 %v1185, %v1185
      %v1188 = vmul.f32 %v1186, %v1186
      %v1189 = vsel %vm448, %v1187, 0.0
      %1190 = vadd.xlane.f32.xlu0 %v1189
      %v1191 = vpop.xlane.xlu0 %1190
      %v1192 = vsel %vm452, %v1188, 0.0
      %1193 = vadd.xlane.f32.xlu0 %v1192
      %v1194 = vpop.xlane.xlu0 %1193
      %v1195 = vmul.f32 %v1191, %v456
      %v1196 = vmul.f32 %v1194, %v456
      %v1197 = vadd.f32 %v1195, 1e-12
      %v1198 = vadd.f32 %v1196, 1e-12
      %v1199 = vrsqrt.pop %v1197
      %v1200 = vrsqrt.pop %v1198
      %v1201 = vmul.f32 %v1185, %v1199
      %v1202 = vmul.f32 %v1186, %v1200
      %v1204 = vlaneseq
      %v1205 = vshrl.u32 %v1204, 7
      %v1206 = vsub.s32 0, %v1205
      %v1207 = vrot.slane %v1175, %v1206
      %v1209 = vmul.f32 %v1201, %v1207
      %v1210 = vmul.f32 %v1202, %v1207
      %v1212 = vlaneseq
      %v1213 = vshrl.u32 %v1212, 7
      %v1214 = vsub.s32 0, %v1213
      %v1215 = vrot.slane %v1176, %v1214
      %v1217 = vadd.f32 %v1209, %v1215
      %v1218 = vadd.f32 %v1210, %v1215
      %v1219 = vpack.c.bf16 %v1218, %v1217
      %v1220 = vld [vmem:[%s9] sm:$0xf]
      %v1221 = vld [vmem:[%s9 + $0x4] sm:$0xf]
      %v1222 = vld [vmem:[%s9 + $0x8] sm:$0xf]
      %v1223 = vld [vmem:[%s9 + $0xc] sm:$0xf]
      %v1224 = vld [vmem:[%s10] sm:$0x1]
      %v1226 = vlaneseq
      %v1227 = vshrl.u32 %v1226, 7
      %v1228 = vsub.s32 0, %v1227
      %v1229 = vrot.slane %v1224, %v1228
      %v1235 = vunpack.c.l.b16 %v1220
      %v1236 = vunpack.c.l.b16 %v1221
      %v1237 = vunpack.c.l.b16 %v1222
      %v1238 = vunpack.c.l.b16 %v1223
      %v1239 = vpack.c.b16 %v1236, %v1235
      %v1240 = vpack.c.b16 %v1238, %v1237
      %v1244 = vsel %vm448, %v1219, 0
      %1246 = vmatprep.subr.bf16.mxu0 0
      %1247 = vmatpush1.bf16.msra.mxu0 0
      %1248 = vmatprep.subr.bf16.mxu0 0
      %1249 = vmatpush1.bf16.msra.mxu0 0
      %1250 = vmatprep.subr.bf16.mxu0 0
      %1251 = vmatpush1.bf16.msra.mxu0 0
      %1252 = vmatprep.subr.bf16.mxu0 0
      %1253 = vmatpush1.bf16.msra.mxu0 0
      %1254 = vmatprep.subr.bf16.mxu0 0
      %1255 = vmatpush1.bf16.msra.mxu0 0
      %1256 = vmatprep.subr.bf16.mxu0 0
      %1257 = vmatpush1.bf16.msra.mxu0 0
      %1258 = vmatprep.subr.bf16.mxu0 0
      %1259 = vmatpush1.bf16.msra.mxu0 %v1240
      %1260 = vmatprep.subr.bf16.mxu0 0
      %1261 = vmatpush1.bf16.msra.mxu0 %v1239
      %1262 = vmatprep.subr.bf16.mxu0 0
      %1263 = vmatpush2.bf16.msra.mxu0 0
      %1264 = vmatprep.subr.bf16.mxu0 0
      %1265 = vmatpush2.bf16.msra.mxu0 0
      %1266 = vmatprep.subr.bf16.mxu0 0
      %1267 = vmatpush2.bf16.msra.mxu0 0
      %1268 = vmatprep.subr.bf16.mxu0 0
      %1269 = vmatpush2.bf16.msra.mxu0 0
      %1270 = vmatprep.subr.bf16.mxu0 0
      %1271 = vmatpush2.bf16.msra.mxu0 0
      %1272 = vmatprep.subr.bf16.mxu0 0
      %1273 = vmatpush2.bf16.msra.mxu0 0
      %1274 = vmatprep.subr.bf16.mxu0 0
      %1275 = vmatpush2.bf16.msra.mxu0 0
      %1276 = vmatprep.subr.bf16.mxu0 0
      %1277 = vmatpush2.bf16.msra.mxu0 0
      %1278 = vmatprep.mubr.bf16.mxu0 0
      %1279 = vmatmul.mubr.bf16.gmra.mxu0 %v1244
      %v1280 = vpop.f32.mrf.mxu0
      %v1281 = vadd.f32 %v1229, %v1280
      %v1282 = vpop.f32.mrf.mxu0
      %v1283 = vpop.f32.mrf.mxu0
      %v1284 = vadd.f32 %v1229, %v1283
      %v1285 = vpop.f32.mrf.mxu0
      %1286 = vdwg.mxu0
      %v1287 = vmul.f32 %v1281, 0.5
      %v1288 = vmul.f32 %v1284, 0.5
      %v1289 = vmul.f32 %v1281, 0.044715
      %v1290 = vmul.f32 %v1284, 0.044715
      %v1291 = vmul.f32 %v1289, %v1281
      %v1292 = vmul.f32 %v1290, %v1284
      %v1293 = vmul.f32 %v1291, %v1281
      %v1294 = vmul.f32 %v1292, %v1284
      %v1295 = vadd.f32 %v1281, %v1293
      %v1296 = vadd.f32 %v1284, %v1294
      %v1297 = vmul.f32 %v1295, 0.7978846
      %v1298 = vmul.f32 %v1296, 0.7978846
      %v1299 = vtanh.pop %v1297
      %v1300 = vtanh.pop %v1298
      %v1301 = vadd.f32 %v1299, 1.0
      %v1302 = vadd.f32 %v1300, 1.0
      %v1303 = vmul.f32 %v1287, %v1301
      %v1304 = vmul.f32 %v1288, %v1302
      %v1305 = vpack.c.bf16 %v1304, %v1303
      %v1306 = vld [vmem:[%s11] sm:$0xf]
      %v1307 = vld [vmem:[%s11 + $0x4] sm:$0xf]
      %v1308 = vld [vmem:[%s11 + $0x8] sm:$0xf]
      %v1309 = vld [vmem:[%s11 + $0xc] sm:$0xf]
      %v1310 = vld [vmem:[%s11 + $0x10] sm:$0xf]
      %v1311 = vld [vmem:[%s11 + $0x14] sm:$0xf]
      %v1312 = vld [vmem:[%s11 + $0x18] sm:$0xf]
      %v1313 = vld [vmem:[%s11 + $0x1c] sm:$0xf]
      %v1314 = vld [vmem:[%s12] sm:$0x1]
      %v1316 = vlaneseq
      %v1317 = vshrl.u32 %v1316, 7
      %v1318 = vsub.s32 0, %v1317
      %v1319 = vrot.slane %v1314, %v1318
      %v1329 = vunpack.c.l.b16 %v1306
      %v1330 = vunpack.c.l.b16 %v1307
      %v1331 = vunpack.c.l.b16 %v1308
      %v1332 = vunpack.c.l.b16 %v1309
      %v1333 = vunpack.c.l.b16 %v1310
      %v1334 = vunpack.c.l.b16 %v1311
      %v1335 = vunpack.c.l.b16 %v1312
      %v1336 = vunpack.c.l.b16 %v1313
      %v1337 = vpack.c.b16 %v1330, %v1329
      %v1338 = vpack.c.b16 %v1332, %v1331
      %v1339 = vpack.c.b16 %v1334, %v1333
      %v1340 = vpack.c.b16 %v1336, %v1335
      %vm1345 = vcmask 523264
      %v1347 = vsel %vm1345, %v1305, 0
      %1349 = vmatprep.subr.bf16.mxu0 0
      %1350 = vmatpush1.bf16.msra.mxu0 0
      %1351 = vmatprep.subr.bf16.mxu0 0
      %1352 = vmatpush1.bf16.msra.mxu0 0
      %1353 = vmatprep.subr.bf16.mxu0 0
      %1354 = vmatpush1.bf16.msra.mxu0 0
      %1355 = vmatprep.subr.bf16.mxu0 0
      %1356 = vmatpush1.bf16.msra.mxu0 0
      %1357 = vmatprep.subr.bf16.mxu0 0
      %1358 = vmatpush1.bf16.msra.mxu0 %v1340
      %1359 = vmatprep.subr.bf16.mxu0 0
      %1360 = vmatpush1.bf16.msra.mxu0 %v1339
      %1361 = vmatprep.subr.bf16.mxu0 0
      %1362 = vmatpush1.bf16.msra.mxu0 %v1338
      %1363 = vmatprep.subr.bf16.mxu0 0
      %1364 = vmatpush1.bf16.msra.mxu0 %v1337
      %1365 = vmatprep.subr.bf16.mxu0 0
      %1366 = vmatpush2.bf16.msra.mxu0 0
      %1367 = vmatprep.subr.bf16.mxu0 0
      %1368 = vmatpush2.bf16.msra.mxu0 0
      %1369 = vmatprep.subr.bf16.mxu0 0
      %1370 = vmatpush2.bf16.msra.mxu0 0
      %1371 = vmatprep.subr.bf16.mxu0 0
      %1372 = vmatpush2.bf16.msra.mxu0 0
      %1373 = vmatprep.subr.bf16.mxu0 0
      %1374 = vmatpush2.bf16.msra.mxu0 0
      %1375 = vmatprep.subr.bf16.mxu0 0
      %1376 = vmatpush2.bf16.msra.mxu0 0
      %1377 = vmatprep.subr.bf16.mxu0 0
      %1378 = vmatpush2.bf16.msra.mxu0 0
      %1379 = vmatprep.subr.bf16.mxu0 0
      %1380 = vmatpush2.bf16.msra.mxu0 0
      %1381 = vmatprep.mubr.bf16.mxu0 0
      %1382 = vmatmul.mubr.bf16.gmra.mxu0 %v1347
      %v1383 = vpop.f32.mrf.mxu0
      %v1384 = vadd.f32 %v1319, %v1383
      %v1385 = vpop.f32.mrf.mxu0
      %v1386 = vpop.f32.mrf.mxu0
      %v1387 = vadd.f32 %v1319, %v1386
      %v1388 = vpop.f32.mrf.mxu0
      %1389 = vdwg.mxu0
      %v1390 = vadd.f32 %v1173, %v1384
      %v1391 = vadd.f32 %v1174, %v1387
      %v1392 = vpack.c.bf16 %v1391, %v1390
      %v1394 = vunpack.c.l.b16 %v1392
      %v1395 = vunpack.c.h.b16 %v1392
      %v1396 = vpack.c.b16 %v1394, %v1394
      %v1397 = vpack.c.b16 %v1395, %v1395
      %vm1400 = vcmask 257024
      %1401 = vst.msk [vmem:[%s440] sm:$0xf] %vm1400, %v1396
      %vm1402 = vcmask 254976
      %vm1403 = vsmask.f32 1280
      %vm1404 = vmand %vm1402, %vm1403
      %v1405 = vld [vmem:[%s440 + $0x4] sm:$0x3]
      %v1406 = vsel %vm1404, %v1397, %v1405
      %1407 = vst [vmem:[%s440 + $0x4] sm:$0x3] %v1406
      %p1408 = scmp.lt.s32.totalorder %s24, 1
      %s1409 = scalar_select %p1408, %s24, 1
      %s1410 = smul.addr %s1409, 2
      %s1411 = smul.addr %s1410, 4
      %s1412 = scalar_lea.vmem %s13, %s1411
      // Predicated region
      $region73: #{_lambda_.5} parent=71 // pred_check
        %p1413 = pneg %p320
      $region74: #{_lambda_.5} parent=71 // pred_check_branch
        %1415 = sbr.rel (%p1413) target = $region76
      $region75: #{_lambda_.5} parent=71 // pred_region
        _
      $region76: #{_lambda_.5} parent=71 // pred_fallthru
        _
    $region72: #{_lambda_.5} parent=5 // pred_fallthru
      _
    %p1416 = scmp.le.s32.totalorder 2, %s19
    // Predicated region
    $region77: #{_lambda_.5} parent=5 // pred_check
      %p1417 = pneg %p1416
    $region78: #{_lambda_.5} parent=5 // pred_check_branch
      %1419 = sbr.rel (%p1417) target = $region80
    $region79: #{_lambda_.5} parent=5 // pred_region
      %s1420 = ssub.s32 %s19, 2
      // Predicated region
      $region81: #{_lambda_.5} parent=79 // pred_check
        %p1421 = pneg %p326
      $region82: #{_lambda_.5} parent=79 // pred_check_branch
        %1423 = sbr.rel (%p1421) target = $region84
      $region83: #{_lambda_.5} parent=79 // pred_region
        %p1424 = scmp.lt.s32.totalorder %s25, 1
        %s1425 = scalar_select %p1424, %s25, 1
        %s1426 = smul.addr %s1425, 2
        %s1427 = smul.addr %s1426, 4
        %s1428 = scalar_lea.vmem %s13, %s1427
      $region84: #{_lambda_.5} parent=79 // pred_fallthru
        _
    $region80: #{_lambda_.5} parent=5 // pred_fallthru
      _
  $region6: #{_lambda_.5} parent=0 // loop_footer
    %s23 = sadd.s32 1, %s19
  $region7: #{_lambda_.5} parent=0 // loop_footer_branch
    %18 = sbr.rel target = $region3
  $region8: #{_lambda_.5} parent=0 // loop_exit
    _

</llo_original>
